<compile_context>
chip_gen: v5e
topology: v5e:2x2
jax: 0.10.0
libtpu: 0.0.40
codegen_flags: <defaults>
</compile_context>

<pallas_src>
import jax
import jax.numpy as jnp
from jax import lax
from jax.experimental import pallas as pl
from jax.experimental.pallas import tpu as pltpu

HID = 32            # hid_dim
N_HEADS = 4         # n_heads
DH = HID // N_HEADS
PF = 64             # pf_dim
EPS = 1e-5          # nn.LayerNorm default eps

# ---- packed parameter slab layout (per layer, all starts 8-row-aligned) ----
SLAB_LANES = 128
LAYER_ROWS = 320
_LN = 0          # rows 0..1   : gamma, beta                (lanes 0:H)
_SAQKV_W = 8     # rows 8..39  : fused Wq|Wk|Wv (self-attn) (lanes 0:3H)
_SAQKV_B = 40    # row  40     : fused bq|bk|bv
_SAO_W = 48      # rows 48..79 : self-attn Wo               (lanes 0:H)
_SAO_B = 80
_EAQ_W = 88      # cross-attn Wq (1/sqrt(DH) folded in)
_EAQ_B = 120
_EAKV_W = 128    # fused Wk|Wv (cross-attn)                 (lanes 0:2H)
_EAKV_B = 160
_EAO_W = 168     # cross-attn Wo
_EAO_B = 200
_PF1_W = 208     # (H, PF)
_PF1_B = 240
_PF2_W = 248     # (PF, H)
_PF2_B = 312


def pack_layer(params):
    """Pack one DecoderLayer's raw weights into a single (LAYER_ROWS, 128) slab."""
    (ln_w, ln_b,
     sa_wq, sa_bq, sa_wk, sa_bk, sa_wv, sa_bv, sa_wo, sa_bo,
     ea_wq, ea_bq, ea_wk, ea_bk, ea_wv, ea_bv, ea_wo, ea_bo,
     pf_w1, pf_b1, pf_w2, pf_b2) = [jnp.asarray(a, jnp.float32) for a in params]
    inv_scale = 1.0 / float(DH) ** 0.5      # scale = sqrt(hid_dim // n_heads)

    slab = jnp.zeros((LAYER_ROWS, SLAB_LANES), jnp.float32)

    def put(s, r0, a):
        a = jnp.atleast_2d(a)
        return s.at[r0:r0 + a.shape[0], 0:a.shape[1]].set(a)

    slab = put(slab, _LN, jnp.concatenate([ln_w.reshape(1, -1), ln_b.reshape(1, -1)], 0))
    slab = put(slab, _SAQKV_W, jnp.concatenate([sa_wq * inv_scale, sa_wk, sa_wv], 1))
    slab = put(slab, _SAQKV_B, jnp.concatenate([sa_bq.reshape(1, -1) * inv_scale,
                                                sa_bk.reshape(1, -1),
                                                sa_bv.reshape(1, -1)], 1))
    slab = put(slab, _SAO_W, sa_wo)
    slab = put(slab, _SAO_B, sa_bo)
    slab = put(slab, _EAQ_W, ea_wq * inv_scale)
    slab = put(slab, _EAQ_B, ea_bq.reshape(1, -1) * inv_scale)
    slab = put(slab, _EAKV_W, jnp.concatenate([ea_wk, ea_wv], 1))
    slab = put(slab, _EAKV_B, jnp.concatenate([ea_bk.reshape(1, -1), ea_bv.reshape(1, -1)], 1))
    slab = put(slab, _EAO_W, ea_wo)
    slab = put(slab, _EAO_B, ea_bo)
    slab = put(slab, _PF1_W, pf_w1)
    slab = put(slab, _PF1_B, pf_b1)
    slab = put(slab, _PF2_W, pf_w2)
    slab = put(slab, _PF2_B, pf_b2)
    return slab


def _make_kernel(n_layers, Ltp, Lsp, Lt, Ls):
    def kernel(trg_ref, src_ref, w_ref, out_ref):
        nb = trg_ref.shape[0] // Ltp            # batches handled by this grid step
        t = trg_ref[...].astype(jnp.float32)    # (nb*Ltp, H)
        s = src_ref[...].astype(jnp.float32)    # (nb*Lsp, H)

        def layer_norm(x, g, b):
            # two independent reductions (E[x], E[x^2]) -> shorter XLU dep chain
            mu = jnp.mean(x, axis=-1, keepdims=True)
            ms = jnp.mean(x * x, axis=-1, keepdims=True)
            return (x - mu) * lax.rsqrt(ms - mu * mu + EPS) * g + b

        def mha(qm, kvm, kv_rows, k_off, v_off, lk_act, wo_w, wo_b):
            # qm  : (nb*Ltp, >=H)   scaled Q in lanes [0, H)
            # kvm : (nb*kv_rows, *) K in lanes [k_off, k_off+H), V in [v_off, v_off+H)
            tiles, vs = [], []
            for b in range(nb):
                kv_b = kvm[b * kv_rows:(b + 1) * kv_rows, :]
                kT = kv_b[:, k_off:k_off + HID].T           # ONE transpose per batch
                vs.append(kv_b[:, v_off:v_off + HID])
                qb = qm[b * Ltp:(b + 1) * Ltp, :]
                for h in range(N_HEADS):                    # static unroll, NH = 4
                    tiles.append(jnp.dot(qb[:, h * DH:(h + 1) * DH],
                                         kT[h * DH:(h + 1) * DH, :],
                                         preferred_element_type=jnp.float32))
            # one stacked softmax over all (batch, head) score tiles
            e = jnp.concatenate(tiles, axis=0)              # (nb*NH*Ltp, kv_rows)
            if lk_act < kv_rows:                            # mask padded key lanes
                lane = lax.broadcasted_iota(jnp.int32, e.shape, 1)
                e = jnp.where(lane < lk_act, e, -1e30)
            m = jnp.max(e, axis=-1, keepdims=True)
            p = jnp.exp(e - m)
            l = jnp.sum(p, axis=-1, keepdims=True)
            inv = pl.reciprocal(l, approx=True)
            inv = inv * (2.0 - l * inv)                     # Newton step -> f32 accuracy
            outs = []
            for b in range(nb):
                acc = None
                for h in range(N_HEADS):
                    r0 = (b * N_HEADS + h) * Ltp
                    ov = jnp.dot(p[r0:r0 + Ltp, :], vs[b][:, h * DH:(h + 1) * DH],
                                 preferred_element_type=jnp.float32) * inv[r0:r0 + Ltp, :]
                    c = jnp.dot(ov, wo_w[h * DH:(h + 1) * DH, :],
                                preferred_element_type=jnp.float32)
                    acc = c if acc is None else acc + c
                outs.append(acc)
            out = outs[0] if nb == 1 else jnp.concatenate(outs, axis=0)
            return out + wo_b

        for L in range(n_layers):                           # fused layer stack
            base = L * LAYER_ROWS
            g = w_ref[base + _LN:base + _LN + 1, 0:HID]
            beta = w_ref[base + _LN + 1:base + _LN + 2, 0:HID]

            # ---- self attention (fused Q|K|V projection, scale folded into Wq) ----
            qkv = (jnp.dot(t, w_ref[base + _SAQKV_W:base + _SAQKV_W + HID, 0:3 * HID],
                           preferred_element_type=jnp.float32)
                   + w_ref[base + _SAQKV_B:base + _SAQKV_B + 1, 0:3 * HID])
            sa = mha(qkv, qkv, Ltp, HID, 2 * HID, Lt,
                     w_ref[base + _SAO_W:base + _SAO_W + HID, 0:HID],
                     w_ref[base + _SAO_B:base + _SAO_B + 1, 0:HID])
            t = layer_norm(t + sa, g, beta)

            # ---- cross attention (K/V of src projected for all batches at once) ----
            q = (jnp.dot(t, w_ref[base + _EAQ_W:base + _EAQ_W + HID, 0:HID],
                         preferred_element_type=jnp.float32)
                 + w_ref[base + _EAQ_B:base + _EAQ_B + 1, 0:HID])
            kv = (jnp.dot(s, w_ref[base + _EAKV_W:base + _EAKV_W + HID, 0:2 * HID],
                          preferred_element_type=jnp.float32)
                  + w_ref[base + _EAKV_B:base + _EAKV_B + 1, 0:2 * HID])
            ea = mha(q, kv, Lsp, 0, HID, Ls,
                     w_ref[base + _EAO_W:base + _EAO_W + HID, 0:HID],
                     w_ref[base + _EAO_B:base + _EAO_B + 1, 0:HID])
            t = layer_norm(t + ea, g, beta)

            # ---- positionwise feedforward (1x1 conv == dense over hidden) ----
            h1 = (jnp.dot(t, w_ref[base + _PF1_W:base + _PF1_W + HID, 0:PF],
                          preferred_element_type=jnp.float32)
                  + w_ref[base + _PF1_B:base + _PF1_B + 1, 0:PF])
            h1 = jnp.maximum(h1, 0.0)                       # ReLU
            ff = (jnp.dot(h1, w_ref[base + _PF2_W:base + _PF2_W + PF, 0:HID],
                          preferred_element_type=jnp.float32)
                  + w_ref[base + _PF2_B:base + _PF2_B + 1, 0:HID])
            t = layer_norm(t + ff, g, beta)

        out_ref[...] = t.astype(out_ref.dtype)
    return kernel


def _round8(x):
    return -(-x // 8) * 8


def _pad_seq(x, to_len):
    B, L, H = x.shape
    return x if L == to_len else jnp.pad(x, ((0, 0), (0, to_len - L), (0, 0)))


def _chip_has_two_tensorcores():
    try:
        kind = jax.devices()[0].device_kind.lower()
    except Exception:
        return False
    return ("v7" in kind) or ("7x" in kind)     # v7x: 2 TensorCores per chip


def decoder_layers(trg, src, layers, *, batch_grid=None):
    """Apply a stack of DecoderLayers in a single pallas_call.

    trg: (B, Lt, H), src: (B, Ls, H); layers: list of 22-element raw param lists.
    batch_grid=True runs one batch element per grid step ("parallel" -> both
    TensorCores on v7x); False (default on 1-TC v5e/v6e) runs everything in one step.
    """
    B, Lt, H = trg.shape
    _, Ls, _ = src.shape
    assert H == HID
    n_layers = len(layers)
    Ltp, Lsp = _round8(Lt), _round8(Ls)

    w = jnp.concatenate([pack_layer(p) for p in layers], axis=0)     # (n*320, 128)
    trg2 = _pad_seq(trg.astype(jnp.float32), Ltp).reshape(B * Ltp, H)
    src2 = _pad_seq(src.astype(jnp.float32), Lsp).reshape(B * Lsp, H)

    if batch_grid is None:
        batch_grid = _chip_has_two_tensorcores() and B > 1

    kernel = _make_kernel(n_layers, Ltp, Lsp, Lt, Ls)

    if batch_grid and B > 1:
        grid = (B,)
        in_specs = [pl.BlockSpec((Ltp, H), lambda i: (i, 0)),
                    pl.BlockSpec((Lsp, H), lambda i: (i, 0)),
                    pl.BlockSpec(w.shape, lambda i: (0, 0))]
        out_specs = pl.BlockSpec((Ltp, H), lambda i: (i, 0))
        dims = ("parallel",)
    else:
        grid = (1,)
        in_specs = [pl.BlockSpec((B * Ltp, H), lambda i: (0, 0)),
                    pl.BlockSpec((B * Lsp, H), lambda i: (0, 0)),
                    pl.BlockSpec(w.shape, lambda i: (0, 0))]
        out_specs = pl.BlockSpec((B * Ltp, H), lambda i: (0, 0))
        dims = ("arbitrary",)

    # TODO(synk): for very deep stacks, switch the unrolled layer loop to a grid
    # axis over layers (per-layer weight blocks) to bound code size.
    out = pl.pallas_call(
        kernel,
        out_shape=jax.ShapeDtypeStruct((B * Ltp, H), trg.dtype),
        grid=grid,
        in_specs=in_specs,
        out_specs=out_specs,
        compiler_params=pltpu.CompilerParams(dimension_semantics=dims),
    )(trg2, src2, w)
    out = out.reshape(B, Ltp, H)
    return out[:, :Lt, :] if Ltp != Lt else out


def decoder_layer(trg, src, params, **kw):
    return decoder_layers(trg, src, [params], **kw)


# ----------------------------- pure-JAX reference -----------------------------
def _ref_attn(q, k, v, wq, bq, wk, bk, wv, bv, wo, bo):
    B, Lq, H = q.shape
    Lk = k.shape[1]
    Q = (q @ wq + bq).reshape(B, Lq, N_HEADS, DH).transpose(0, 2, 1, 3)
    K = (k @ wk + bk).reshape(B, Lk, N_HEADS, DH).transpose(0, 2, 1, 3)
    V = (v @ wv + bv).reshape(B, Lk, N_HEADS, DH).transpose(0, 2, 1, 3)
    e = jnp.einsum('bhqd,bhkd->bhqk', Q, K) / jnp.sqrt(float(DH))
    a = jax.nn.softmax(e, axis=-1)
    x = jnp.einsum('bhqk,bhkd->bhqd', a, V).transpose(0, 2, 1, 3).reshape(B, Lq, H)
    return x @ wo + bo


def _ref_decoder_layer(trg, src, params):
    (ln_w, ln_b,
     sa_wq, sa_bq, sa_wk, sa_bk, sa_wv, sa_bv, sa_wo, sa_bo,
     ea_wq, ea_bq, ea_wk, ea_bk, ea_wv, ea_bv, ea_wo, ea_bo,
     pf_w1, pf_b1, pf_w2, pf_b2) = params

    def ln(x):
        mu = jnp.mean(x, axis=-1, keepdims=True)
        var = jnp.mean((x - mu) ** 2, axis=-1, keepdims=True)
        return (x - mu) / jnp.sqrt(var + EPS) * ln_w + ln_b

    t = ln(trg + _ref_attn(trg, trg, trg, sa_wq, sa_bq, sa_wk, sa_bk, sa_wv, sa_bv, sa_wo, sa_bo))
    t = ln(t + _ref_attn(t, src, src, ea_wq, ea_bq, ea_wk, ea_bk, ea_wv, ea_bv, ea_wo, ea_bo))
    t = ln(t + (jnp.maximum(t @ pf_w1 + pf_b1, 0.0) @ pf_w2 + pf_b2))
    return t


# ----------------------------------- main --------------------------------------
if __name__ == "__main__":
    key = jax.random.PRNGKey(0)
    B, Lt, Ls = 2, 8, 12

    def make_layer_params(k):
        ks = jax.random.split(k, 24)
        n = lambda kk, shape, s=0.1: (s * jax.random.normal(kk, shape)).astype(jnp.float32)
        return [
            (1.0 + 0.1 * jax.random.normal(ks[0], (1, HID))).astype(jnp.float32),  # ln weight
            n(ks[1], (1, HID)),                                                    # ln bias
            # self-attention: w_q, b_q, w_k, b_k, w_v, b_v, fc_w, fc_b
            n(ks[2], (HID, HID)), n(ks[3], (1, HID)),
            n(ks[4], (HID, HID)), n(ks[5], (1, HID)),
            n(ks[6], (HID, HID)), n(ks[7], (1, HID)),
            n(ks[8], (HID, HID)), n(ks[9], (1, HID)),
            # cross-attention
            n(ks[10], (HID, HID)), n(ks[11], (1, HID)),
            n(ks[12], (HID, HID)), n(ks[13], (1, HID)),
            n(ks[14], (HID, HID)), n(ks[15], (1, HID)),
            n(ks[16], (HID, HID)), n(ks[17], (1, HID)),
            # positionwise feedforward (1x1 conv == dense over hidden axis)
            n(ks[18], (HID, PF)), n(ks[19], (1, PF)),
            n(ks[20], (PF, HID)), n(ks[21], (1, HID)),
        ]

    k0, k1, k2, k3 = jax.random.split(key, 4)
    params0 = make_layer_params(k0)
    params1 = make_layer_params(k1)
    trg = jax.random.normal(k2, (B, Lt, HID), jnp.float32)
    src = jax.random.normal(k3, (B, Ls, HID), jnp.float32)

    # single layer, single fused grid step (best config on 1-TC v5e/v6e)
    out1 = jax.block_until_ready(decoder_layer(trg, src, params0, batch_grid=False))
    ref1 = _ref_decoder_layer(trg, src, params0)
    assert out1.shape == (B, Lt, HID)
    err1 = float(jnp.max(jnp.abs(out1 - ref1)))
    assert jnp.allclose(out1, ref1, atol=2e-4, rtol=2e-4), err1

    # two layers fused in ONE pallas_call + per-batch "parallel" grid (v7x path)
    out2 = jax.block_until_ready(
        decoder_layers(trg, src, [params0, params1], batch_grid=True))
    ref2 = _ref_decoder_layer(ref1, src, params1)
    err2 = float(jnp.max(jnp.abs(out2 - ref2)))
    assert out2.shape == (B, Lt, HID)
    assert jnp.allclose(out2, ref2, atol=5e-4, rtol=5e-4), err2

    print("KERNEL_OK")
</pallas_src>

<mosaic_0001>
module attributes {stable_mosaic.version = 11 : i64} {
  func.func @kernel(%arg0: i32, %arg1: memref<16x32xf32, #tpu.memory_space<vmem>>, %arg2: memref<32x32xf32, #tpu.memory_space<vmem>>, %arg3: memref<320x128xf32, #tpu.memory_space<vmem>>, %arg4: memref<16x32xf32, #tpu.memory_space<vmem>>) attributes {dimension_semantics = [#tpu.dimension_semantics<arbitrary>], iteration_bounds = array<i64: 1>, scalar_prefetch = 0 : i64, scratch_operands = 0 : i64, tpu.core_type = #tpu.core_type<tc>, window_params = [{pipeline_mode = #tpu.pipeline_mode<synchronous>, transform_indices = @transform_0, window_bounds = array<i64: 16, 32>}, {pipeline_mode = #tpu.pipeline_mode<synchronous>, transform_indices = @transform_1, window_bounds = array<i64: 32, 32>}, {pipeline_mode = #tpu.pipeline_mode<synchronous>, transform_indices = @transform_2, window_bounds = array<i64: 320, 128>}, {pipeline_mode = #tpu.pipeline_mode<synchronous>, transform_indices = @transform_3, window_bounds = array<i64: 16, 32>}]} {
    %c0 = arith.constant 0 : index
    %c0_0 = arith.constant 0 : index
    %0 = vector.load %arg1[%c0, %c0_0] : memref<16x32xf32, #tpu.memory_space<vmem>>, vector<16x32xf32>
    %c0_1 = arith.constant 0 : index
    %c0_2 = arith.constant 0 : index
    %1 = vector.load %arg2[%c0_1, %c0_2] : memref<32x32xf32, #tpu.memory_space<vmem>>, vector<32x32xf32>
    %c0_3 = arith.constant 0 : index
    %c0_4 = arith.constant 0 : index
    %2 = vector.load %arg3[%c0_3, %c0_4] : memref<320x128xf32, #tpu.memory_space<vmem>>, vector<1x32xf32>
    %c1 = arith.constant 1 : index
    %c0_5 = arith.constant 0 : index
    %3 = vector.load %arg3[%c1, %c0_5] : memref<320x128xf32, #tpu.memory_space<vmem>>, vector<1x32xf32>
    %c8 = arith.constant 8 : index
    %c0_6 = arith.constant 0 : index
    %4 = vector.load %arg3[%c8, %c0_6] : memref<320x128xf32, #tpu.memory_space<vmem>>, vector<32x96xf32>
    %cst = arith.constant dense<0.000000e+00> : vector<16x96xf32>
    %5 = tpu.matmul %0, %4, %cst {dimension_numbers = #tpu.dot_dimension_numbers<[1], [0], [0], [1], [0, 0, 1, 1], [], []>} : vector<16x32xf32>, vector<32x96xf32>, vector<16x96xf32> -> vector<16x96xf32>
    %c40 = arith.constant 40 : index
    %c0_7 = arith.constant 0 : index
    %6 = vector.load %arg3[%c40, %c0_7] : memref<320x128xf32, #tpu.memory_space<vmem>>, vector<1x96xf32>
    %7 = vector.broadcast %6 : vector<1x96xf32> to vector<16x96xf32>
    %8 = arith.addf %5, %7 : vector<16x96xf32>
    %c48 = arith.constant 48 : index
    %c0_8 = arith.constant 0 : index
    %9 = vector.load %arg3[%c48, %c0_8] : memref<320x128xf32, #tpu.memory_space<vmem>>, vector<32x32xf32>
    %c80 = arith.constant 80 : index
    %c0_9 = arith.constant 0 : index
    %10 = vector.load %arg3[%c80, %c0_9] : memref<320x128xf32, #tpu.memory_space<vmem>>, vector<1x32xf32>
    %11 = vector.extract_strided_slice %8 {offsets = [0, 0], sizes = [8, 96], strides = [1, 1]} : vector<16x96xf32> to vector<8x96xf32>
    %12 = vector.extract_strided_slice %11 {offsets = [0, 32], sizes = [8, 32], strides = [1, 1]} : vector<8x96xf32> to vector<8x32xf32>
    %13 = tpu.transpose %12, [1, 0] : vector<8x32xf32> -> vector<32x8xf32>
    %14 = vector.extract_strided_slice %11 {offsets = [0, 64], sizes = [8, 32], strides = [1, 1]} : vector<8x96xf32> to vector<8x32xf32>
    %15 = vector.extract_strided_slice %8 {offsets = [0, 0], sizes = [8, 96], strides = [1, 1]} : vector<16x96xf32> to vector<8x96xf32>
    %16 = vector.extract_strided_slice %15 {offsets = [0, 0], sizes = [8, 8], strides = [1, 1]} : vector<8x96xf32> to vector<8x8xf32>
    %17 = vector.extract_strided_slice %13 {offsets = [0, 0], sizes = [8, 8], strides = [1, 1]} : vector<32x8xf32> to vector<8x8xf32>
    %cst_10 = arith.constant dense<0.000000e+00> : vector<8x8xf32>
    %18 = tpu.matmul %16, %17, %cst_10 {dimension_numbers = #tpu.dot_dimension_numbers<[1], [0], [0], [1], [0, 0, 1, 1], [], []>} : vector<8x8xf32>, vector<8x8xf32>, vector<8x8xf32> -> vector<8x8xf32>
    %19 = vector.extract_strided_slice %15 {offsets = [0, 8], sizes = [8, 8], strides = [1, 1]} : vector<8x96xf32> to vector<8x8xf32>
    %20 = vector.extract_strided_slice %13 {offsets = [8, 0], sizes = [8, 8], strides = [1, 1]} : vector<32x8xf32> to vector<8x8xf32>
    %cst_11 = arith.constant dense<0.000000e+00> : vector<8x8xf32>
    %21 = tpu.matmul %19, %20, %cst_11 {dimension_numbers = #tpu.dot_dimension_numbers<[1], [0], [0], [1], [0, 0, 1, 1], [], []>} : vector<8x8xf32>, vector<8x8xf32>, vector<8x8xf32> -> vector<8x8xf32>
    %22 = vector.extract_strided_slice %15 {offsets = [0, 16], sizes = [8, 8], strides = [1, 1]} : vector<8x96xf32> to vector<8x8xf32>
    %23 = vector.extract_strided_slice %13 {offsets = [16, 0], sizes = [8, 8], strides = [1, 1]} : vector<32x8xf32> to vector<8x8xf32>
    %cst_12 = arith.constant dense<0.000000e+00> : vector<8x8xf32>
    %24 = tpu.matmul %22, %23, %cst_12 {dimension_numbers = #tpu.dot_dimension_numbers<[1], [0], [0], [1], [0, 0, 1, 1], [], []>} : vector<8x8xf32>, vector<8x8xf32>, vector<8x8xf32> -> vector<8x8xf32>
    %25 = vector.extract_strided_slice %15 {offsets = [0, 24], sizes = [8, 8], strides = [1, 1]} : vector<8x96xf32> to vector<8x8xf32>
    %26 = vector.extract_strided_slice %13 {offsets = [24, 0], sizes = [8, 8], strides = [1, 1]} : vector<32x8xf32> to vector<8x8xf32>
    %cst_13 = arith.constant dense<0.000000e+00> : vector<8x8xf32>
    %27 = tpu.matmul %25, %26, %cst_13 {dimension_numbers = #tpu.dot_dimension_numbers<[1], [0], [0], [1], [0, 0, 1, 1], [], []>} : vector<8x8xf32>, vector<8x8xf32>, vector<8x8xf32> -> vector<8x8xf32>
    %28 = vector.extract_strided_slice %8 {offsets = [8, 0], sizes = [8, 96], strides = [1, 1]} : vector<16x96xf32> to vector<8x96xf32>
    %29 = vector.extract_strided_slice %28 {offsets = [0, 32], sizes = [8, 32], strides = [1, 1]} : vector<8x96xf32> to vector<8x32xf32>
    %30 = tpu.transpose %29, [1, 0] : vector<8x32xf32> -> vector<32x8xf32>
    %31 = vector.extract_strided_slice %28 {offsets = [0, 64], sizes = [8, 32], strides = [1, 1]} : vector<8x96xf32> to vector<8x32xf32>
    %32 = vector.extract_strided_slice %8 {offsets = [8, 0], sizes = [8, 96], strides = [1, 1]} : vector<16x96xf32> to vector<8x96xf32>
    %33 = vector.extract_strided_slice %32 {offsets = [0, 0], sizes = [8, 8], strides = [1, 1]} : vector<8x96xf32> to vector<8x8xf32>
    %34 = vector.extract_strided_slice %30 {offsets = [0, 0], sizes = [8, 8], strides = [1, 1]} : vector<32x8xf32> to vector<8x8xf32>
    %cst_14 = arith.constant dense<0.000000e+00> : vector<8x8xf32>
    %35 = tpu.matmul %33, %34, %cst_14 {dimension_numbers = #tpu.dot_dimension_numbers<[1], [0], [0], [1], [0, 0, 1, 1], [], []>} : vector<8x8xf32>, vector<8x8xf32>, vector<8x8xf32> -> vector<8x8xf32>
    %36 = vector.extract_strided_slice %32 {offsets = [0, 8], sizes = [8, 8], strides = [1, 1]} : vector<8x96xf32> to vector<8x8xf32>
    %37 = vector.extract_strided_slice %30 {offsets = [8, 0], sizes = [8, 8], strides = [1, 1]} : vector<32x8xf32> to vector<8x8xf32>
    %cst_15 = arith.constant dense<0.000000e+00> : vector<8x8xf32>
    %38 = tpu.matmul %36, %37, %cst_15 {dimension_numbers = #tpu.dot_dimension_numbers<[1], [0], [0], [1], [0, 0, 1, 1], [], []>} : vector<8x8xf32>, vector<8x8xf32>, vector<8x8xf32> -> vector<8x8xf32>
    %39 = vector.extract_strided_slice %32 {offsets = [0, 16], sizes = [8, 8], strides = [1, 1]} : vector<8x96xf32> to vector<8x8xf32>
    %40 = vector.extract_strided_slice %30 {offsets = [16, 0], sizes = [8, 8], strides = [1, 1]} : vector<32x8xf32> to vector<8x8xf32>
    %cst_16 = arith.constant dense<0.000000e+00> : vector<8x8xf32>
    %41 = tpu.matmul %39, %40, %cst_16 {dimension_numbers = #tpu.dot_dimension_numbers<[1], [0], [0], [1], [0, 0, 1, 1], [], []>} : vector<8x8xf32>, vector<8x8xf32>, vector<8x8xf32> -> vector<8x8xf32>
    %42 = vector.extract_strided_slice %32 {offsets = [0, 24], sizes = [8, 8], strides = [1, 1]} : vector<8x96xf32> to vector<8x8xf32>
    %43 = vector.extract_strided_slice %30 {offsets = [24, 0], sizes = [8, 8], strides = [1, 1]} : vector<32x8xf32> to vector<8x8xf32>
    %cst_17 = arith.constant dense<0.000000e+00> : vector<8x8xf32>
    %44 = tpu.matmul %42, %43, %cst_17 {dimension_numbers = #tpu.dot_dimension_numbers<[1], [0], [0], [1], [0, 0, 1, 1], [], []>} : vector<8x8xf32>, vector<8x8xf32>, vector<8x8xf32> -> vector<8x8xf32>
    %45 = tpu.concatenate %18, %21, %24, %27, %35, %38, %41, %44 in 0 : vector<8x8xf32>, vector<8x8xf32>, vector<8x8xf32>, vector<8x8xf32>, vector<8x8xf32>, vector<8x8xf32>, vector<8x8xf32>, vector<8x8xf32> -> vector<64x8xf32>
    %cst_18 = arith.constant dense<0xFF800000> : vector<64xf32>
    %46 = vector.multi_reduction <maximumf>, %45, %cst_18 [1] : vector<64x8xf32> to vector<64xf32>
    %47 = vector.shape_cast %46 : vector<64xf32> to vector<64x1xf32>
    %48 = vector.broadcast %47 : vector<64x1xf32> to vector<64x8xf32>
    %49 = arith.subf %45, %48 : vector<64x8xf32>
    %50 = math.exp %49 : vector<64x8xf32>
    %cst_19 = arith.constant dense<0.000000e+00> : vector<64xf32>
    %51 = vector.multi_reduction <add>, %50, %cst_19 [1] : vector<64x8xf32> to vector<64xf32>
    %52 = vector.shape_cast %51 : vector<64xf32> to vector<64x1xf32>
    %53 = tpu.reciprocal %52 {approx = true} : vector<64x1xf32> -> vector<64x1xf32>
    %54 = arith.mulf %52, %53 : vector<64x1xf32>
    %cst_20 = arith.constant 2.000000e+00 : f32
    %55 = vector.broadcast %cst_20 : f32 to vector<64x1xf32>
    %56 = arith.subf %55, %54 : vector<64x1xf32>
    %57 = arith.mulf %53, %56 : vector<64x1xf32>
    %58 = vector.extract_strided_slice %50 {offsets = [0, 0], sizes = [8, 8], strides = [1, 1]} : vector<64x8xf32> to vector<8x8xf32>
    %59 = vector.extract_strided_slice %14 {offsets = [0, 0], sizes = [8, 8], strides = [1, 1]} : vector<8x32xf32> to vector<8x8xf32>
    %cst_21 = arith.constant dense<0.000000e+00> : vector<8x8xf32>
    %60 = tpu.matmul %58, %59, %cst_21 {dimension_numbers = #tpu.dot_dimension_numbers<[1], [0], [0], [1], [0, 0, 1, 1], [], []>} : vector<8x8xf32>, vector<8x8xf32>, vector<8x8xf32> -> vector<8x8xf32>
    %61 = vector.extract_strided_slice %57 {offsets = [0, 0], sizes = [8, 1], strides = [1, 1]} : vector<64x1xf32> to vector<8x1xf32>
    %62 = vector.broadcast %61 : vector<8x1xf32> to vector<8x8xf32>
    %63 = arith.mulf %60, %62 : vector<8x8xf32>
    %64 = vector.extract_strided_slice %9 {offsets = [0, 0], sizes = [8, 32], strides = [1, 1]} : vector<32x32xf32> to vector<8x32xf32>
    %cst_22 = arith.constant dense<0.000000e+00> : vector<8x32xf32>
    %65 = tpu.matmul %63, %64, %cst_22 {dimension_numbers = #tpu.dot_dimension_numbers<[1], [0], [0], [1], [0, 0, 1, 1], [], []>} : vector<8x8xf32>, vector<8x32xf32>, vector<8x32xf32> -> vector<8x32xf32>
    %66 = vector.extract_strided_slice %50 {offsets = [8, 0], sizes = [8, 8], strides = [1, 1]} : vector<64x8xf32> to vector<8x8xf32>
    %67 = vector.extract_strided_slice %14 {offsets = [0, 8], sizes = [8, 8], strides = [1, 1]} : vector<8x32xf32> to vector<8x8xf32>
    %cst_23 = arith.constant dense<0.000000e+00> : vector<8x8xf32>
    %68 = tpu.matmul %66, %67, %cst_23 {dimension_numbers = #tpu.dot_dimension_numbers<[1], [0], [0], [1], [0, 0, 1, 1], [], []>} : vector<8x8xf32>, vector<8x8xf32>, vector<8x8xf32> -> vector<8x8xf32>
    %69 = vector.extract_strided_slice %57 {offsets = [8, 0], sizes = [8, 1], strides = [1, 1]} : vector<64x1xf32> to vector<8x1xf32>
    %70 = vector.broadcast %69 : vector<8x1xf32> to vector<8x8xf32>
    %71 = arith.mulf %68, %70 : vector<8x8xf32>
    %72 = vector.extract_strided_slice %9 {offsets = [8, 0], sizes = [8, 32], strides = [1, 1]} : vector<32x32xf32> to vector<8x32xf32>
    %cst_24 = arith.constant dense<0.000000e+00> : vector<8x32xf32>
    %73 = tpu.matmul %71, %72, %cst_24 {dimension_numbers = #tpu.dot_dimension_numbers<[1], [0], [0], [1], [0, 0, 1, 1], [], []>} : vector<8x8xf32>, vector<8x32xf32>, vector<8x32xf32> -> vector<8x32xf32>
    %74 = arith.addf %65, %73 : vector<8x32xf32>
    %75 = vector.extract_strided_slice %50 {offsets = [16, 0], sizes = [8, 8], strides = [1, 1]} : vector<64x8xf32> to vector<8x8xf32>
    %76 = vector.extract_strided_slice %14 {offsets = [0, 16], sizes = [8, 8], strides = [1, 1]} : vector<8x32xf32> to vector<8x8xf32>
    %cst_25 = arith.constant dense<0.000000e+00> : vector<8x8xf32>
    %77 = tpu.matmul %75, %76, %cst_25 {dimension_numbers = #tpu.dot_dimension_numbers<[1], [0], [0], [1], [0, 0, 1, 1], [], []>} : vector<8x8xf32>, vector<8x8xf32>, vector<8x8xf32> -> vector<8x8xf32>
    %78 = vector.extract_strided_slice %57 {offsets = [16, 0], sizes = [8, 1], strides = [1, 1]} : vector<64x1xf32> to vector<8x1xf32>
    %79 = vector.broadcast %78 : vector<8x1xf32> to vector<8x8xf32>
    %80 = arith.mulf %77, %79 : vector<8x8xf32>
    %81 = vector.extract_strided_slice %9 {offsets = [16, 0], sizes = [8, 32], strides = [1, 1]} : vector<32x32xf32> to vector<8x32xf32>
    %cst_26 = arith.constant dense<0.000000e+00> : vector<8x32xf32>
    %82 = tpu.matmul %80, %81, %cst_26 {dimension_numbers = #tpu.dot_dimension_numbers<[1], [0], [0], [1], [0, 0, 1, 1], [], []>} : vector<8x8xf32>, vector<8x32xf32>, vector<8x32xf32> -> vector<8x32xf32>
    %83 = arith.addf %74, %82 : vector<8x32xf32>
    %84 = vector.extract_strided_slice %50 {offsets = [24, 0], sizes = [8, 8], strides = [1, 1]} : vector<64x8xf32> to vector<8x8xf32>
    %85 = vector.extract_strided_slice %14 {offsets = [0, 24], sizes = [8, 8], strides = [1, 1]} : vector<8x32xf32> to vector<8x8xf32>
    %cst_27 = arith.constant dense<0.000000e+00> : vector<8x8xf32>
    %86 = tpu.matmul %84, %85, %cst_27 {dimension_numbers = #tpu.dot_dimension_numbers<[1], [0], [0], [1], [0, 0, 1, 1], [], []>} : vector<8x8xf32>, vector<8x8xf32>, vector<8x8xf32> -> vector<8x8xf32>
    %87 = vector.extract_strided_slice %57 {offsets = [24, 0], sizes = [8, 1], strides = [1, 1]} : vector<64x1xf32> to vector<8x1xf32>
    %88 = vector.broadcast %87 : vector<8x1xf32> to vector<8x8xf32>
    %89 = arith.mulf %86, %88 : vector<8x8xf32>
    %90 = vector.extract_strided_slice %9 {offsets = [24, 0], sizes = [8, 32], strides = [1, 1]} : vector<32x32xf32> to vector<8x32xf32>
    %cst_28 = arith.constant dense<0.000000e+00> : vector<8x32xf32>
    %91 = tpu.matmul %89, %90, %cst_28 {dimension_numbers = #tpu.dot_dimension_numbers<[1], [0], [0], [1], [0, 0, 1, 1], [], []>} : vector<8x8xf32>, vector<8x32xf32>, vector<8x32xf32> -> vector<8x32xf32>
    %92 = arith.addf %83, %91 : vector<8x32xf32>
    %93 = vector.extract_strided_slice %50 {offsets = [32, 0], sizes = [8, 8], strides = [1, 1]} : vector<64x8xf32> to vector<8x8xf32>
    %94 = vector.extract_strided_slice %31 {offsets = [0, 0], sizes = [8, 8], strides = [1, 1]} : vector<8x32xf32> to vector<8x8xf32>
    %cst_29 = arith.constant dense<0.000000e+00> : vector<8x8xf32>
    %95 = tpu.matmul %93, %94, %cst_29 {dimension_numbers = #tpu.dot_dimension_numbers<[1], [0], [0], [1], [0, 0, 1, 1], [], []>} : vector<8x8xf32>, vector<8x8xf32>, vector<8x8xf32> -> vector<8x8xf32>
    %96 = vector.extract_strided_slice %57 {offsets = [32, 0], sizes = [8, 1], strides = [1, 1]} : vector<64x1xf32> to vector<8x1xf32>
    %97 = vector.broadcast %96 : vector<8x1xf32> to vector<8x8xf32>
    %98 = arith.mulf %95, %97 : vector<8x8xf32>
    %99 = vector.extract_strided_slice %9 {offsets = [0, 0], sizes = [8, 32], strides = [1, 1]} : vector<32x32xf32> to vector<8x32xf32>
    %cst_30 = arith.constant dense<0.000000e+00> : vector<8x32xf32>
    %100 = tpu.matmul %98, %99, %cst_30 {dimension_numbers = #tpu.dot_dimension_numbers<[1], [0], [0], [1], [0, 0, 1, 1], [], []>} : vector<8x8xf32>, vector<8x32xf32>, vector<8x32xf32> -> vector<8x32xf32>
    %101 = vector.extract_strided_slice %50 {offsets = [40, 0], sizes = [8, 8], strides = [1, 1]} : vector<64x8xf32> to vector<8x8xf32>
    %102 = vector.extract_strided_slice %31 {offsets = [0, 8], sizes = [8, 8], strides = [1, 1]} : vector<8x32xf32> to vector<8x8xf32>
    %cst_31 = arith.constant dense<0.000000e+00> : vector<8x8xf32>
    %103 = tpu.matmul %101, %102, %cst_31 {dimension_numbers = #tpu.dot_dimension_numbers<[1], [0], [0], [1], [0, 0, 1, 1], [], []>} : vector<8x8xf32>, vector<8x8xf32>, vector<8x8xf32> -> vector<8x8xf32>
    %104 = vector.extract_strided_slice %57 {offsets = [40, 0], sizes = [8, 1], strides = [1, 1]} : vector<64x1xf32> to vector<8x1xf32>
    %105 = vector.broadcast %104 : vector<8x1xf32> to vector<8x8xf32>
    %106 = arith.mulf %103, %105 : vector<8x8xf32>
    %107 = vector.extract_strided_slice %9 {offsets = [8, 0], sizes = [8, 32], strides = [1, 1]} : vector<32x32xf32> to vector<8x32xf32>
    %cst_32 = arith.constant dense<0.000000e+00> : vector<8x32xf32>
    %108 = tpu.matmul %106, %107, %cst_32 {dimension_numbers = #tpu.dot_dimension_numbers<[1], [0], [0], [1], [0, 0, 1, 1], [], []>} : vector<8x8xf32>, vector<8x32xf32>, vector<8x32xf32> -> vector<8x32xf32>
    %109 = arith.addf %100, %108 : vector<8x32xf32>
    %110 = vector.extract_strided_slice %50 {offsets = [48, 0], sizes = [8, 8], strides = [1, 1]} : vector<64x8xf32> to vector<8x8xf32>
    %111 = vector.extract_strided_slice %31 {offsets = [0, 16], sizes = [8, 8], strides = [1, 1]} : vector<8x32xf32> to vector<8x8xf32>
    %cst_33 = arith.constant dense<0.000000e+00> : vector<8x8xf32>
    %112 = tpu.matmul %110, %111, %cst_33 {dimension_numbers = #tpu.dot_dimension_numbers<[1], [0], [0], [1], [0, 0, 1, 1], [], []>} : vector<8x8xf32>, vector<8x8xf32>, vector<8x8xf32> -> vector<8x8xf32>
    %113 = vector.extract_strided_slice %57 {offsets = [48, 0], sizes = [8, 1], strides = [1, 1]} : vector<64x1xf32> to vector<8x1xf32>
    %114 = vector.broadcast %113 : vector<8x1xf32> to vector<8x8xf32>
    %115 = arith.mulf %112, %114 : vector<8x8xf32>
    %116 = vector.extract_strided_slice %9 {offsets = [16, 0], sizes = [8, 32], strides = [1, 1]} : vector<32x32xf32> to vector<8x32xf32>
    %cst_34 = arith.constant dense<0.000000e+00> : vector<8x32xf32>
    %117 = tpu.matmul %115, %116, %cst_34 {dimension_numbers = #tpu.dot_dimension_numbers<[1], [0], [0], [1], [0, 0, 1, 1], [], []>} : vector<8x8xf32>, vector<8x32xf32>, vector<8x32xf32> -> vector<8x32xf32>
    %118 = arith.addf %109, %117 : vector<8x32xf32>
    %119 = vector.extract_strided_slice %50 {offsets = [56, 0], sizes = [8, 8], strides = [1, 1]} : vector<64x8xf32> to vector<8x8xf32>
    %120 = vector.extract_strided_slice %31 {offsets = [0, 24], sizes = [8, 8], strides = [1, 1]} : vector<8x32xf32> to vector<8x8xf32>
    %cst_35 = arith.constant dense<0.000000e+00> : vector<8x8xf32>
    %121 = tpu.matmul %119, %120, %cst_35 {dimension_numbers = #tpu.dot_dimension_numbers<[1], [0], [0], [1], [0, 0, 1, 1], [], []>} : vector<8x8xf32>, vector<8x8xf32>, vector<8x8xf32> -> vector<8x8xf32>
    %122 = vector.extract_strided_slice %57 {offsets = [56, 0], sizes = [8, 1], strides = [1, 1]} : vector<64x1xf32> to vector<8x1xf32>
    %123 = vector.broadcast %122 : vector<8x1xf32> to vector<8x8xf32>
    %124 = arith.mulf %121, %123 : vector<8x8xf32>
    %125 = vector.extract_strided_slice %9 {offsets = [24, 0], sizes = [8, 32], strides = [1, 1]} : vector<32x32xf32> to vector<8x32xf32>
    %cst_36 = arith.constant dense<0.000000e+00> : vector<8x32xf32>
    %126 = tpu.matmul %124, %125, %cst_36 {dimension_numbers = #tpu.dot_dimension_numbers<[1], [0], [0], [1], [0, 0, 1, 1], [], []>} : vector<8x8xf32>, vector<8x32xf32>, vector<8x32xf32> -> vector<8x32xf32>
    %127 = arith.addf %118, %126 : vector<8x32xf32>
    %128 = tpu.concatenate %92, %127 in 0 : vector<8x32xf32>, vector<8x32xf32> -> vector<16x32xf32>
    %129 = vector.broadcast %10 : vector<1x32xf32> to vector<16x32xf32>
    %130 = arith.addf %128, %129 : vector<16x32xf32>
    %131 = arith.addf %0, %130 : vector<16x32xf32>
    %cst_37 = arith.constant dense<0.000000e+00> : vector<16xf32>
    %132 = vector.multi_reduction <add>, %131, %cst_37 [1] : vector<16x32xf32> to vector<16xf32>
    %133 = vector.shape_cast %132 : vector<16xf32> to vector<16x1xf32>
    %cst_38 = arith.constant 3.200000e+01 : f32
    %134 = vector.broadcast %cst_38 : f32 to vector<16x1xf32>
    %135 = arith.divf %133, %134 : vector<16x1xf32>
    %136 = arith.mulf %131, %131 : vector<16x32xf32>
    %cst_39 = arith.constant dense<0.000000e+00> : vector<16xf32>
    %137 = vector.multi_reduction <add>, %136, %cst_39 [1] : vector<16x32xf32> to vector<16xf32>
    %138 = vector.shape_cast %137 : vector<16xf32> to vector<16x1xf32>
    %cst_40 = arith.constant 3.200000e+01 : f32
    %139 = vector.broadcast %cst_40 : f32 to vector<16x1xf32>
    %140 = arith.divf %138, %139 : vector<16x1xf32>
    %141 = vector.broadcast %135 : vector<16x1xf32> to vector<16x32xf32>
    %142 = arith.subf %131, %141 : vector<16x32xf32>
    %143 = arith.mulf %135, %135 : vector<16x1xf32>
    %144 = arith.subf %140, %143 : vector<16x1xf32>
    %cst_41 = arith.constant 9.99999974E-6 : f32
    %145 = vector.broadcast %cst_41 : f32 to vector<16x1xf32>
    %146 = arith.addf %144, %145 : vector<16x1xf32>
    %147 = math.rsqrt %146 : vector<16x1xf32>
    %148 = vector.broadcast %147 : vector<16x1xf32> to vector<16x32xf32>
    %149 = arith.mulf %142, %148 : vector<16x32xf32>
    %150 = vector.broadcast %2 : vector<1x32xf32> to vector<16x32xf32>
    %151 = arith.mulf %149, %150 : vector<16x32xf32>
    %152 = vector.broadcast %3 : vector<1x32xf32> to vector<16x32xf32>
    %153 = arith.addf %151, %152 : vector<16x32xf32>
    %c88 = arith.constant 88 : index
    %c0_42 = arith.constant 0 : index
    %154 = vector.load %arg3[%c88, %c0_42] : memref<320x128xf32, #tpu.memory_space<vmem>>, vector<32x32xf32>
    %cst_43 = arith.constant dense<0.000000e+00> : vector<16x32xf32>
    %155 = tpu.matmul %153, %154, %cst_43 {dimension_numbers = #tpu.dot_dimension_numbers<[1], [0], [0], [1], [0, 0, 1, 1], [], []>} : vector<16x32xf32>, vector<32x32xf32>, vector<16x32xf32> -> vector<16x32xf32>
    %c120 = arith.constant 120 : index
    %c0_44 = arith.constant 0 : index
    %156 = vector.load %arg3[%c120, %c0_44] : memref<320x128xf32, #tpu.memory_space<vmem>>, vector<1x32xf32>
    %157 = vector.broadcast %156 : vector<1x32xf32> to vector<16x32xf32>
    %158 = arith.addf %155, %157 : vector<16x32xf32>
    %c128 = arith.constant 128 : index
    %c0_45 = arith.constant 0 : index
    %159 = vector.load %arg3[%c128, %c0_45] : memref<320x128xf32, #tpu.memory_space<vmem>>, vector<32x64xf32>
    %cst_46 = arith.constant dense<0.000000e+00> : vector<32x64xf32>
    %160 = tpu.matmul %1, %159, %cst_46 {dimension_numbers = #tpu.dot_dimension_numbers<[1], [0], [0], [1], [0, 0, 1, 1], [], []>} : vector<32x32xf32>, vector<32x64xf32>, vector<32x64xf32> -> vector<32x64xf32>
    %c160 = arith.constant 160 : index
    %c0_47 = arith.constant 0 : index
    %161 = vector.load %arg3[%c160, %c0_47] : memref<320x128xf32, #tpu.memory_space<vmem>>, vector<1x64xf32>
    %162 = vector.broadcast %161 : vector<1x64xf32> to vector<32x64xf32>
    %163 = arith.addf %160, %162 : vector<32x64xf32>
    %c168 = arith.constant 168 : index
    %c0_48 = arith.constant 0 : index
    %164 = vector.load %arg3[%c168, %c0_48] : memref<320x128xf32, #tpu.memory_space<vmem>>, vector<32x32xf32>
    %c200 = arith.constant 200 : index
    %c0_49 = arith.constant 0 : index
    %165 = vector.load %arg3[%c200, %c0_49] : memref<320x128xf32, #tpu.memory_space<vmem>>, vector<1x32xf32>
    %166 = vector.extract_strided_slice %163 {offsets = [0, 0], sizes = [16, 64], strides = [1, 1]} : vector<32x64xf32> to vector<16x64xf32>
    %167 = vector.extract_strided_slice %166 {offsets = [0, 0], sizes = [16, 32], strides = [1, 1]} : vector<16x64xf32> to vector<16x32xf32>
    %168 = tpu.transpose %167, [1, 0] : vector<16x32xf32> -> vector<32x16xf32>
    %169 = vector.extract_strided_slice %166 {offsets = [0, 32], sizes = [16, 32], strides = [1, 1]} : vector<16x64xf32> to vector<16x32xf32>
    %170 = vector.extract_strided_slice %158 {offsets = [0, 0], sizes = [8, 32], strides = [1, 1]} : vector<16x32xf32> to vector<8x32xf32>
    %171 = vector.extract_strided_slice %170 {offsets = [0, 0], sizes = [8, 8], strides = [1, 1]} : vector<8x32xf32> to vector<8x8xf32>
    %172 = vector.extract_strided_slice %168 {offsets = [0, 0], sizes = [8, 16], strides = [1, 1]} : vector<32x16xf32> to vector<8x16xf32>
    %cst_50 = arith.constant dense<0.000000e+00> : vector<8x16xf32>
    %173 = tpu.matmul %171, %172, %cst_50 {dimension_numbers = #tpu.dot_dimension_numbers<[1], [0], [0], [1], [0, 0, 1, 1], [], []>} : vector<8x8xf32>, vector<8x16xf32>, vector<8x16xf32> -> vector<8x16xf32>
    %174 = vector.extract_strided_slice %170 {offsets = [0, 8], sizes = [8, 8], strides = [1, 1]} : vector<8x32xf32> to vector<8x8xf32>
    %175 = vector.extract_strided_slice %168 {offsets = [8, 0], sizes = [8, 16], strides = [1, 1]} : vector<32x16xf32> to vector<8x16xf32>
    %cst_51 = arith.constant dense<0.000000e+00> : vector<8x16xf32>
    %176 = tpu.matmul %174, %175, %cst_51 {dimension_numbers = #tpu.dot_dimension_numbers<[1], [0], [0], [1], [0, 0, 1, 1], [], []>} : vector<8x8xf32>, vector<8x16xf32>, vector<8x16xf32> -> vector<8x16xf32>
    %177 = vector.extract_strided_slice %170 {offsets = [0, 16], sizes = [8, 8], strides = [1, 1]} : vector<8x32xf32> to vector<8x8xf32>
    %178 = vector.extract_strided_slice %168 {offsets = [16, 0], sizes = [8, 16], strides = [1, 1]} : vector<32x16xf32> to vector<8x16xf32>
    %cst_52 = arith.constant dense<0.000000e+00> : vector<8x16xf32>
    %179 = tpu.matmul %177, %178, %cst_52 {dimension_numbers = #tpu.dot_dimension_numbers<[1], [0], [0], [1], [0, 0, 1, 1], [], []>} : vector<8x8xf32>, vector<8x16xf32>, vector<8x16xf32> -> vector<8x16xf32>
    %180 = vector.extract_strided_slice %170 {offsets = [0, 24], sizes = [8, 8], strides = [1, 1]} : vector<8x32xf32> to vector<8x8xf32>
    %181 = vector.extract_strided_slice %168 {offsets = [24, 0], sizes = [8, 16], strides = [1, 1]} : vector<32x16xf32> to vector<8x16xf32>
    %cst_53 = arith.constant dense<0.000000e+00> : vector<8x16xf32>
    %182 = tpu.matmul %180, %181, %cst_53 {dimension_numbers = #tpu.dot_dimension_numbers<[1], [0], [0], [1], [0, 0, 1, 1], [], []>} : vector<8x8xf32>, vector<8x16xf32>, vector<8x16xf32> -> vector<8x16xf32>
    %183 = vector.extract_strided_slice %163 {offsets = [16, 0], sizes = [16, 64], strides = [1, 1]} : vector<32x64xf32> to vector<16x64xf32>
    %184 = vector.extract_strided_slice %183 {offsets = [0, 0], sizes = [16, 32], strides = [1, 1]} : vector<16x64xf32> to vector<16x32xf32>
    %185 = tpu.transpose %184, [1, 0] : vector<16x32xf32> -> vector<32x16xf32>
    %186 = vector.extract_strided_slice %183 {offsets = [0, 32], sizes = [16, 32], strides = [1, 1]} : vector<16x64xf32> to vector<16x32xf32>
    %187 = vector.extract_strided_slice %158 {offsets = [8, 0], sizes = [8, 32], strides = [1, 1]} : vector<16x32xf32> to vector<8x32xf32>
    %188 = vector.extract_strided_slice %187 {offsets = [0, 0], sizes = [8, 8], strides = [1, 1]} : vector<8x32xf32> to vector<8x8xf32>
    %189 = vector.extract_strided_slice %185 {offsets = [0, 0], sizes = [8, 16], strides = [1, 1]} : vector<32x16xf32> to vector<8x16xf32>
    %cst_54 = arith.constant dense<0.000000e+00> : vector<8x16xf32>
    %190 = tpu.matmul %188, %189, %cst_54 {dimension_numbers = #tpu.dot_dimension_numbers<[1], [0], [0], [1], [0, 0, 1, 1], [], []>} : vector<8x8xf32>, vector<8x16xf32>, vector<8x16xf32> -> vector<8x16xf32>
    %191 = vector.extract_strided_slice %187 {offsets = [0, 8], sizes = [8, 8], strides = [1, 1]} : vector<8x32xf32> to vector<8x8xf32>
    %192 = vector.extract_strided_slice %185 {offsets = [8, 0], sizes = [8, 16], strides = [1, 1]} : vector<32x16xf32> to vector<8x16xf32>
    %cst_55 = arith.constant dense<0.000000e+00> : vector<8x16xf32>
    %193 = tpu.matmul %191, %192, %cst_55 {dimension_numbers = #tpu.dot_dimension_numbers<[1], [0], [0], [1], [0, 0, 1, 1], [], []>} : vector<8x8xf32>, vector<8x16xf32>, vector<8x16xf32> -> vector<8x16xf32>
    %194 = vector.extract_strided_slice %187 {offsets = [0, 16], sizes = [8, 8], strides = [1, 1]} : vector<8x32xf32> to vector<8x8xf32>
    %195 = vector.extract_strided_slice %185 {offsets = [16, 0], sizes = [8, 16], strides = [1, 1]} : vector<32x16xf32> to vector<8x16xf32>
    %cst_56 = arith.constant dense<0.000000e+00> : vector<8x16xf32>
    %196 = tpu.matmul %194, %195, %cst_56 {dimension_numbers = #tpu.dot_dimension_numbers<[1], [0], [0], [1], [0, 0, 1, 1], [], []>} : vector<8x8xf32>, vector<8x16xf32>, vector<8x16xf32> -> vector<8x16xf32>
    %197 = vector.extract_strided_slice %187 {offsets = [0, 24], sizes = [8, 8], strides = [1, 1]} : vector<8x32xf32> to vector<8x8xf32>
    %198 = vector.extract_strided_slice %185 {offsets = [24, 0], sizes = [8, 16], strides = [1, 1]} : vector<32x16xf32> to vector<8x16xf32>
    %cst_57 = arith.constant dense<0.000000e+00> : vector<8x16xf32>
    %199 = tpu.matmul %197, %198, %cst_57 {dimension_numbers = #tpu.dot_dimension_numbers<[1], [0], [0], [1], [0, 0, 1, 1], [], []>} : vector<8x8xf32>, vector<8x16xf32>, vector<8x16xf32> -> vector<8x16xf32>
    %200 = tpu.concatenate %173, %176, %179, %182, %190, %193, %196, %199 in 0 : vector<8x16xf32>, vector<8x16xf32>, vector<8x16xf32>, vector<8x16xf32>, vector<8x16xf32>, vector<8x16xf32>, vector<8x16xf32>, vector<8x16xf32> -> vector<64x16xf32>
    %201 = tpu.iota {dimensions = array<i32: 1>} : vector<64x16xi32>
    %c12_i32 = arith.constant 12 : i32
    %202 = vector.broadcast %c12_i32 : i32 to vector<64x16xi32>
    %203 = arith.cmpi slt, %201, %202 : vector<64x16xi32>
    %cst_58 = arith.constant -1.000000e+30 : f32
    %204 = vector.broadcast %cst_58 : f32 to vector<64x16xf32>
    %205 = arith.select %203, %200, %204 : vector<64x16xi1>, vector<64x16xf32>
    %cst_59 = arith.constant dense<0xFF800000> : vector<64xf32>
    %206 = vector.multi_reduction <maximumf>, %205, %cst_59 [1] : vector<64x16xf32> to vector<64xf32>
    %207 = vector.shape_cast %206 : vector<64xf32> to vector<64x1xf32>
    %208 = vector.broadcast %207 : vector<64x1xf32> to vector<64x16xf32>
    %209 = arith.subf %205, %208 : vector<64x16xf32>
    %210 = math.exp %209 : vector<64x16xf32>
    %cst_60 = arith.constant dense<0.000000e+00> : vector<64xf32>
    %211 = vector.multi_reduction <add>, %210, %cst_60 [1] : vector<64x16xf32> to vector<64xf32>
    %212 = vector.shape_cast %211 : vector<64xf32> to vector<64x1xf32>
    %213 = tpu.reciprocal %212 {approx = true} : vector<64x1xf32> -> vector<64x1xf32>
    %214 = arith.mulf %212, %213 : vector<64x1xf32>
    %cst_61 = arith.constant 2.000000e+00 : f32
    %215 = vector.broadcast %cst_61 : f32 to vector<64x1xf32>
    %216 = arith.subf %215, %214 : vector<64x1xf32>
    %217 = arith.mulf %213, %216 : vector<64x1xf32>
    %218 = vector.extract_strided_slice %210 {offsets = [0, 0], sizes = [8, 16], strides = [1, 1]} : vector<64x16xf32> to vector<8x16xf32>
    %219 = vector.extract_strided_slice %169 {offsets = [0, 0], sizes = [16, 8], strides = [1, 1]} : vector<16x32xf32> to vector<16x8xf32>
    %cst_62 = arith.constant dense<0.000000e+00> : vector<8x8xf32>
    %220 = tpu.matmul %218, %219, %cst_62 {dimension_numbers = #tpu.dot_dimension_numbers<[1], [0], [0], [1], [0, 0, 1, 1], [], []>} : vector<8x16xf32>, vector<16x8xf32>, vector<8x8xf32> -> vector<8x8xf32>
    %221 = vector.extract_strided_slice %217 {offsets = [0, 0], sizes = [8, 1], strides = [1, 1]} : vector<64x1xf32> to vector<8x1xf32>
    %222 = vector.broadcast %221 : vector<8x1xf32> to vector<8x8xf32>
    %223 = arith.mulf %220, %222 : vector<8x8xf32>
    %224 = vector.extract_strided_slice %164 {offsets = [0, 0], sizes = [8, 32], strides = [1, 1]} : vector<32x32xf32> to vector<8x32xf32>
    %cst_63 = arith.constant dense<0.000000e+00> : vector<8x32xf32>
    %225 = tpu.matmul %223, %224, %cst_63 {dimension_numbers = #tpu.dot_dimension_numbers<[1], [0], [0], [1], [0, 0, 1, 1], [], []>} : vector<8x8xf32>, vector<8x32xf32>, vector<8x32xf32> -> vector<8x32xf32>
    %226 = vector.extract_strided_slice %210 {offsets = [8, 0], sizes = [8, 16], strides = [1, 1]} : vector<64x16xf32> to vector<8x16xf32>
    %227 = vector.extract_strided_slice %169 {offsets = [0, 8], sizes = [16, 8], strides = [1, 1]} : vector<16x32xf32> to vector<16x8xf32>
    %cst_64 = arith.constant dense<0.000000e+00> : vector<8x8xf32>
    %228 = tpu.matmul %226, %227, %cst_64 {dimension_numbers = #tpu.dot_dimension_numbers<[1], [0], [0], [1], [0, 0, 1, 1], [], []>} : vector<8x16xf32>, vector<16x8xf32>, vector<8x8xf32> -> vector<8x8xf32>
    %229 = vector.extract_strided_slice %217 {offsets = [8, 0], sizes = [8, 1], strides = [1, 1]} : vector<64x1xf32> to vector<8x1xf32>
    %230 = vector.broadcast %229 : vector<8x1xf32> to vector<8x8xf32>
    %231 = arith.mulf %228, %230 : vector<8x8xf32>
    %232 = vector.extract_strided_slice %164 {offsets = [8, 0], sizes = [8, 32], strides = [1, 1]} : vector<32x32xf32> to vector<8x32xf32>
    %cst_65 = arith.constant dense<0.000000e+00> : vector<8x32xf32>
    %233 = tpu.matmul %231, %232, %cst_65 {dimension_numbers = #tpu.dot_dimension_numbers<[1], [0], [0], [1], [0, 0, 1, 1], [], []>} : vector<8x8xf32>, vector<8x32xf32>, vector<8x32xf32> -> vector<8x32xf32>
    %234 = arith.addf %225, %233 : vector<8x32xf32>
    %235 = vector.extract_strided_slice %210 {offsets = [16, 0], sizes = [8, 16], strides = [1, 1]} : vector<64x16xf32> to vector<8x16xf32>
    %236 = vector.extract_strided_slice %169 {offsets = [0, 16], sizes = [16, 8], strides = [1, 1]} : vector<16x32xf32> to vector<16x8xf32>
    %cst_66 = arith.constant dense<0.000000e+00> : vector<8x8xf32>
    %237 = tpu.matmul %235, %236, %cst_66 {dimension_numbers = #tpu.dot_dimension_numbers<[1], [0], [0], [1], [0, 0, 1, 1], [], []>} : vector<8x16xf32>, vector<16x8xf32>, vector<8x8xf32> -> vector<8x8xf32>
    %238 = vector.extract_strided_slice %217 {offsets = [16, 0], sizes = [8, 1], strides = [1, 1]} : vector<64x1xf32> to vector<8x1xf32>
    %239 = vector.broadcast %238 : vector<8x1xf32> to vector<8x8xf32>
    %240 = arith.mulf %237, %239 : vector<8x8xf32>
    %241 = vector.extract_strided_slice %164 {offsets = [16, 0], sizes = [8, 32], strides = [1, 1]} : vector<32x32xf32> to vector<8x32xf32>
    %cst_67 = arith.constant dense<0.000000e+00> : vector<8x32xf32>
    %242 = tpu.matmul %240, %241, %cst_67 {dimension_numbers = #tpu.dot_dimension_numbers<[1], [0], [0], [1], [0, 0, 1, 1], [], []>} : vector<8x8xf32>, vector<8x32xf32>, vector<8x32xf32> -> vector<8x32xf32>
    %243 = arith.addf %234, %242 : vector<8x32xf32>
    %244 = vector.extract_strided_slice %210 {offsets = [24, 0], sizes = [8, 16], strides = [1, 1]} : vector<64x16xf32> to vector<8x16xf32>
    %245 = vector.extract_strided_slice %169 {offsets = [0, 24], sizes = [16, 8], strides = [1, 1]} : vector<16x32xf32> to vector<16x8xf32>
    %cst_68 = arith.constant dense<0.000000e+00> : vector<8x8xf32>
    %246 = tpu.matmul %244, %245, %cst_68 {dimension_numbers = #tpu.dot_dimension_numbers<[1], [0], [0], [1], [0, 0, 1, 1], [], []>} : vector<8x16xf32>, vector<16x8xf32>, vector<8x8xf32> -> vector<8x8xf32>
    %247 = vector.extract_strided_slice %217 {offsets = [24, 0], sizes = [8, 1], strides = [1, 1]} : vector<64x1xf32> to vector<8x1xf32>
    %248 = vector.broadcast %247 : vector<8x1xf32> to vector<8x8xf32>
    %249 = arith.mulf %246, %248 : vector<8x8xf32>
    %250 = vector.extract_strided_slice %164 {offsets = [24, 0], sizes = [8, 32], strides = [1, 1]} : vector<32x32xf32> to vector<8x32xf32>
    %cst_69 = arith.constant dense<0.000000e+00> : vector<8x32xf32>
    %251 = tpu.matmul %249, %250, %cst_69 {dimension_numbers = #tpu.dot_dimension_numbers<[1], [0], [0], [1], [0, 0, 1, 1], [], []>} : vector<8x8xf32>, vector<8x32xf32>, vector<8x32xf32> -> vector<8x32xf32>
    %252 = arith.addf %243, %251 : vector<8x32xf32>
    %253 = vector.extract_strided_slice %210 {offsets = [32, 0], sizes = [8, 16], strides = [1, 1]} : vector<64x16xf32> to vector<8x16xf32>
    %254 = vector.extract_strided_slice %186 {offsets = [0, 0], sizes = [16, 8], strides = [1, 1]} : vector<16x32xf32> to vector<16x8xf32>
    %cst_70 = arith.constant dense<0.000000e+00> : vector<8x8xf32>
    %255 = tpu.matmul %253, %254, %cst_70 {dimension_numbers = #tpu.dot_dimension_numbers<[1], [0], [0], [1], [0, 0, 1, 1], [], []>} : vector<8x16xf32>, vector<16x8xf32>, vector<8x8xf32> -> vector<8x8xf32>
    %256 = vector.extract_strided_slice %217 {offsets = [32, 0], sizes = [8, 1], strides = [1, 1]} : vector<64x1xf32> to vector<8x1xf32>
    %257 = vector.broadcast %256 : vector<8x1xf32> to vector<8x8xf32>
    %258 = arith.mulf %255, %257 : vector<8x8xf32>
    %259 = vector.extract_strided_slice %164 {offsets = [0, 0], sizes = [8, 32], strides = [1, 1]} : vector<32x32xf32> to vector<8x32xf32>
    %cst_71 = arith.constant dense<0.000000e+00> : vector<8x32xf32>
    %260 = tpu.matmul %258, %259, %cst_71 {dimension_numbers = #tpu.dot_dimension_numbers<[1], [0], [0], [1], [0, 0, 1, 1], [], []>} : vector<8x8xf32>, vector<8x32xf32>, vector<8x32xf32> -> vector<8x32xf32>
    %261 = vector.extract_strided_slice %210 {offsets = [40, 0], sizes = [8, 16], strides = [1, 1]} : vector<64x16xf32> to vector<8x16xf32>
    %262 = vector.extract_strided_slice %186 {offsets = [0, 8], sizes = [16, 8], strides = [1, 1]} : vector<16x32xf32> to vector<16x8xf32>
    %cst_72 = arith.constant dense<0.000000e+00> : vector<8x8xf32>
    %263 = tpu.matmul %261, %262, %cst_72 {dimension_numbers = #tpu.dot_dimension_numbers<[1], [0], [0], [1], [0, 0, 1, 1], [], []>} : vector<8x16xf32>, vector<16x8xf32>, vector<8x8xf32> -> vector<8x8xf32>
    %264 = vector.extract_strided_slice %217 {offsets = [40, 0], sizes = [8, 1], strides = [1, 1]} : vector<64x1xf32> to vector<8x1xf32>
    %265 = vector.broadcast %264 : vector<8x1xf32> to vector<8x8xf32>
    %266 = arith.mulf %263, %265 : vector<8x8xf32>
    %267 = vector.extract_strided_slice %164 {offsets = [8, 0], sizes = [8, 32], strides = [1, 1]} : vector<32x32xf32> to vector<8x32xf32>
    %cst_73 = arith.constant dense<0.000000e+00> : vector<8x32xf32>
    %268 = tpu.matmul %266, %267, %cst_73 {dimension_numbers = #tpu.dot_dimension_numbers<[1], [0], [0], [1], [0, 0, 1, 1], [], []>} : vector<8x8xf32>, vector<8x32xf32>, vector<8x32xf32> -> vector<8x32xf32>
    %269 = arith.addf %260, %268 : vector<8x32xf32>
    %270 = vector.extract_strided_slice %210 {offsets = [48, 0], sizes = [8, 16], strides = [1, 1]} : vector<64x16xf32> to vector<8x16xf32>
    %271 = vector.extract_strided_slice %186 {offsets = [0, 16], sizes = [16, 8], strides = [1, 1]} : vector<16x32xf32> to vector<16x8xf32>
    %cst_74 = arith.constant dense<0.000000e+00> : vector<8x8xf32>
    %272 = tpu.matmul %270, %271, %cst_74 {dimension_numbers = #tpu.dot_dimension_numbers<[1], [0], [0], [1], [0, 0, 1, 1], [], []>} : vector<8x16xf32>, vector<16x8xf32>, vector<8x8xf32> -> vector<8x8xf32>
    %273 = vector.extract_strided_slice %217 {offsets = [48, 0], sizes = [8, 1], strides = [1, 1]} : vector<64x1xf32> to vector<8x1xf32>
    %274 = vector.broadcast %273 : vector<8x1xf32> to vector<8x8xf32>
    %275 = arith.mulf %272, %274 : vector<8x8xf32>
    %276 = vector.extract_strided_slice %164 {offsets = [16, 0], sizes = [8, 32], strides = [1, 1]} : vector<32x32xf32> to vector<8x32xf32>
    %cst_75 = arith.constant dense<0.000000e+00> : vector<8x32xf32>
    %277 = tpu.matmul %275, %276, %cst_75 {dimension_numbers = #tpu.dot_dimension_numbers<[1], [0], [0], [1], [0, 0, 1, 1], [], []>} : vector<8x8xf32>, vector<8x32xf32>, vector<8x32xf32> -> vector<8x32xf32>
    %278 = arith.addf %269, %277 : vector<8x32xf32>
    %279 = vector.extract_strided_slice %210 {offsets = [56, 0], sizes = [8, 16], strides = [1, 1]} : vector<64x16xf32> to vector<8x16xf32>
    %280 = vector.extract_strided_slice %186 {offsets = [0, 24], sizes = [16, 8], strides = [1, 1]} : vector<16x32xf32> to vector<16x8xf32>
    %cst_76 = arith.constant dense<0.000000e+00> : vector<8x8xf32>
    %281 = tpu.matmul %279, %280, %cst_76 {dimension_numbers = #tpu.dot_dimension_numbers<[1], [0], [0], [1], [0, 0, 1, 1], [], []>} : vector<8x16xf32>, vector<16x8xf32>, vector<8x8xf32> -> vector<8x8xf32>
    %282 = vector.extract_strided_slice %217 {offsets = [56, 0], sizes = [8, 1], strides = [1, 1]} : vector<64x1xf32> to vector<8x1xf32>
    %283 = vector.broadcast %282 : vector<8x1xf32> to vector<8x8xf32>
    %284 = arith.mulf %281, %283 : vector<8x8xf32>
    %285 = vector.extract_strided_slice %164 {offsets = [24, 0], sizes = [8, 32], strides = [1, 1]} : vector<32x32xf32> to vector<8x32xf32>
    %cst_77 = arith.constant dense<0.000000e+00> : vector<8x32xf32>
    %286 = tpu.matmul %284, %285, %cst_77 {dimension_numbers = #tpu.dot_dimension_numbers<[1], [0], [0], [1], [0, 0, 1, 1], [], []>} : vector<8x8xf32>, vector<8x32xf32>, vector<8x32xf32> -> vector<8x32xf32>
    %287 = arith.addf %278, %286 : vector<8x32xf32>
    %288 = tpu.concatenate %252, %287 in 0 : vector<8x32xf32>, vector<8x32xf32> -> vector<16x32xf32>
    %289 = vector.broadcast %165 : vector<1x32xf32> to vector<16x32xf32>
    %290 = arith.addf %288, %289 : vector<16x32xf32>
    %291 = arith.addf %153, %290 : vector<16x32xf32>
    %cst_78 = arith.constant dense<0.000000e+00> : vector<16xf32>
    %292 = vector.multi_reduction <add>, %291, %cst_78 [1] : vector<16x32xf32> to vector<16xf32>
    %293 = vector.shape_cast %292 : vector<16xf32> to vector<16x1xf32>
    %cst_79 = arith.constant 3.200000e+01 : f32
    %294 = vector.broadcast %cst_79 : f32 to vector<16x1xf32>
    %295 = arith.divf %293, %294 : vector<16x1xf32>
    %296 = arith.mulf %291, %291 : vector<16x32xf32>
    %cst_80 = arith.constant dense<0.000000e+00> : vector<16xf32>
    %297 = vector.multi_reduction <add>, %296, %cst_80 [1] : vector<16x32xf32> to vector<16xf32>
    %298 = vector.shape_cast %297 : vector<16xf32> to vector<16x1xf32>
    %cst_81 = arith.constant 3.200000e+01 : f32
    %299 = vector.broadcast %cst_81 : f32 to vector<16x1xf32>
    %300 = arith.divf %298, %299 : vector<16x1xf32>
    %301 = vector.broadcast %295 : vector<16x1xf32> to vector<16x32xf32>
    %302 = arith.subf %291, %301 : vector<16x32xf32>
    %303 = arith.mulf %295, %295 : vector<16x1xf32>
    %304 = arith.subf %300, %303 : vector<16x1xf32>
    %cst_82 = arith.constant 9.99999974E-6 : f32
    %305 = vector.broadcast %cst_82 : f32 to vector<16x1xf32>
    %306 = arith.addf %304, %305 : vector<16x1xf32>
    %307 = math.rsqrt %306 : vector<16x1xf32>
    %308 = vector.broadcast %307 : vector<16x1xf32> to vector<16x32xf32>
    %309 = arith.mulf %302, %308 : vector<16x32xf32>
    %310 = vector.broadcast %2 : vector<1x32xf32> to vector<16x32xf32>
    %311 = arith.mulf %309, %310 : vector<16x32xf32>
    %312 = vector.broadcast %3 : vector<1x32xf32> to vector<16x32xf32>
    %313 = arith.addf %311, %312 : vector<16x32xf32>
    %c208 = arith.constant 208 : index
    %c0_83 = arith.constant 0 : index
    %314 = vector.load %arg3[%c208, %c0_83] : memref<320x128xf32, #tpu.memory_space<vmem>>, vector<32x64xf32>
    %cst_84 = arith.constant dense<0.000000e+00> : vector<16x64xf32>
    %315 = tpu.matmul %313, %314, %cst_84 {dimension_numbers = #tpu.dot_dimension_numbers<[1], [0], [0], [1], [0, 0, 1, 1], [], []>} : vector<16x32xf32>, vector<32x64xf32>, vector<16x64xf32> -> vector<16x64xf32>
    %c240 = arith.constant 240 : index
    %c0_85 = arith.constant 0 : index
    %316 = vector.load %arg3[%c240, %c0_85] : memref<320x128xf32, #tpu.memory_space<vmem>>, vector<1x64xf32>
    %317 = vector.broadcast %316 : vector<1x64xf32> to vector<16x64xf32>
    %318 = arith.addf %315, %317 : vector<16x64xf32>
    %cst_86 = arith.constant 0.000000e+00 : f32
    %319 = vector.broadcast %cst_86 : f32 to vector<16x64xf32>
    %320 = arith.maximumf %318, %319 : vector<16x64xf32>
    %c248 = arith.constant 248 : index
    %c0_87 = arith.constant 0 : index
    %321 = vector.load %arg3[%c248, %c0_87] : memref<320x128xf32, #tpu.memory_space<vmem>>, vector<64x32xf32>
    %cst_88 = arith.constant dense<0.000000e+00> : vector<16x32xf32>
    %322 = tpu.matmul %320, %321, %cst_88 {dimension_numbers = #tpu.dot_dimension_numbers<[1], [0], [0], [1], [0, 0, 1, 1], [], []>} : vector<16x64xf32>, vector<64x32xf32>, vector<16x32xf32> -> vector<16x32xf32>
    %c312 = arith.constant 312 : index
    %c0_89 = arith.constant 0 : index
    %323 = vector.load %arg3[%c312, %c0_89] : memref<320x128xf32, #tpu.memory_space<vmem>>, vector<1x32xf32>
    %324 = vector.broadcast %323 : vector<1x32xf32> to vector<16x32xf32>
    %325 = arith.addf %322, %324 : vector<16x32xf32>
    %326 = arith.addf %313, %325 : vector<16x32xf32>
    %cst_90 = arith.constant dense<0.000000e+00> : vector<16xf32>
    %327 = vector.multi_reduction <add>, %326, %cst_90 [1] : vector<16x32xf32> to vector<16xf32>
    %328 = vector.shape_cast %327 : vector<16xf32> to vector<16x1xf32>
    %cst_91 = arith.constant 3.200000e+01 : f32
    %329 = vector.broadcast %cst_91 : f32 to vector<16x1xf32>
    %330 = arith.divf %328, %329 : vector<16x1xf32>
    %331 = arith.mulf %326, %326 : vector<16x32xf32>
    %cst_92 = arith.constant dense<0.000000e+00> : vector<16xf32>
    %332 = vector.multi_reduction <add>, %331, %cst_92 [1] : vector<16x32xf32> to vector<16xf32>
    %333 = vector.shape_cast %332 : vector<16xf32> to vector<16x1xf32>
    %cst_93 = arith.constant 3.200000e+01 : f32
    %334 = vector.broadcast %cst_93 : f32 to vector<16x1xf32>
    %335 = arith.divf %333, %334 : vector<16x1xf32>
    %336 = vector.broadcast %330 : vector<16x1xf32> to vector<16x32xf32>
    %337 = arith.subf %326, %336 : vector<16x32xf32>
    %338 = arith.mulf %330, %330 : vector<16x1xf32>
    %339 = arith.subf %335, %338 : vector<16x1xf32>
    %cst_94 = arith.constant 9.99999974E-6 : f32
    %340 = vector.broadcast %cst_94 : f32 to vector<16x1xf32>
    %341 = arith.addf %339, %340 : vector<16x1xf32>
    %342 = math.rsqrt %341 : vector<16x1xf32>
    %343 = vector.broadcast %342 : vector<16x1xf32> to vector<16x32xf32>
    %344 = arith.mulf %337, %343 : vector<16x32xf32>
    %345 = vector.broadcast %2 : vector<1x32xf32> to vector<16x32xf32>
    %346 = arith.mulf %344, %345 : vector<16x32xf32>
    %347 = vector.broadcast %3 : vector<1x32xf32> to vector<16x32xf32>
    %348 = arith.addf %346, %347 : vector<16x32xf32>
    %c0_95 = arith.constant 0 : index
    %c0_96 = arith.constant 0 : index
    %349 = vector.load %arg4[%c0_95, %c0_96] : memref<16x32xf32, #tpu.memory_space<vmem>>, vector<16x32xf32>
    tpu.vector_store %arg4[%c0_95, %c0_96], %348 {strides = array<i32>} : memref<16x32xf32, #tpu.memory_space<vmem>>, vector<16x32xf32>,
    return
  }
  func.func @transform_0(%arg0: i32) -> (i32, i32) {
    %c0_i32 = arith.constant 0 : i32
    %c0_i32_0 = arith.constant 0 : i32
    %c0_i32_1 = arith.constant 0 : i32
    return %c0_i32, %c0_i32_0 : i32, i32
  }
  func.func @transform_1(%arg0: i32) -> (i32, i32) {
    %c0_i32 = arith.constant 0 : i32
    %c0_i32_0 = arith.constant 0 : i32
    %c0_i32_1 = arith.constant 0 : i32
    return %c0_i32, %c0_i32_0 : i32, i32
  }
  func.func @transform_2(%arg0: i32) -> (i32, i32) {
    %c0_i32 = arith.constant 0 : i32
    %c0_i32_0 = arith.constant 0 : i32
    %c0_i32_1 = arith.constant 0 : i32
    return %c0_i32, %c0_i32_0 : i32, i32
  }
  func.func @transform_3(%arg0: i32) -> (i32, i32) {
    %c0_i32 = arith.constant 0 : i32
    %c0_i32_0 = arith.constant 0 : i32
    %c0_i32_1 = arith.constant 0 : i32
    return %c0_i32, %c0_i32_0 : i32, i32
  }
}

</mosaic_0001>

<llo_original>
// kernel: tpu_custom_call.1
$region0: #{tpu_custom_call.1}
  #allocation0 [shape = 'u32[]', space=smem, size = 0x4, offset = 0x4, fixed_abs, tag = 'smem constant byte address 0x4 - core index']
  #allocation1 [shape = 'u32[72,128]{1,0:T(1,128)}', space=vmem, size = 0x9000, scoped, tag = 'internal scratch']
  %s0 = inlined_call_operand.hbm [shape: f32[16,32], index: 0, kind: input, shape index: {}]
  %s1 = inlined_call_operand.hbm [shape: f32[32,32], index: 1, kind: input, shape index: {}]
  %s2 = inlined_call_operand.hbm [shape: f32[320,128], index: 2, kind: input, shape index: {}]
  %s3 = inlined_call_operand.hbm [shape: f32[16,32], index: 3, kind: output, shape index: {}]
  %s4 = sld [smem:[#allocation0]]
  $region34: #{tpu_custom_call.1} parent=0
    _
  %s6 = ssub.s32 1, %s4
  %s7 = scalar_select 0, %s6, %s4
  $region1: #{tpu_custom_call.1} parent=0
    #allocation2 [shape = 'u8[8192]{0}', space=vmem, size = 0x2000, scoped, tag = 'input window, operand 0, single buffered']
    #allocation3 [shape = 's32[1]{0}', space=sflag, size = 0x4, scoped, tag = 'scoped memory for tpu_custom_call.1']
    #allocation4 [shape = 's32[1]{0}', space=sflag, size = 0x4, scoped, tag = 'scoped memory for tpu_custom_call.1']
    #allocation5 [shape = 'u8[16384]{0}', space=vmem, size = 0x4000, scoped, tag = 'input window, operand 1, single buffered']
    #allocation6 [shape = 's32[1]{0}', space=sflag, size = 0x4, scoped, tag = 'scoped memory for tpu_custom_call.1']
    #allocation7 [shape = 'u8[163840]{0}', space=vmem, size = 0x28000, scoped, tag = 'input window, operand 2, single buffered']
    #allocation8 [shape = 'u8[8192]{0}', space=vmem, size = 0x2000, scoped, tag = 'output window, operand 0, single buffered']
    %8 = vsyncpa [#allocation3], 0
    %9 = vsyncpa [#allocation6], 0
    %10 = vsyncpa [#allocation4], 0
    // Predicated region
    $region2: #{tpu_custom_call.1} parent=1 // pred_check
      _
    $region3: #{tpu_custom_call.1} parent=1 // pred_check_branch
      %12 = sbr.rel (0) target = $region5
    $region4: #{tpu_custom_call.1} parent=1 // pred_region
      %14 = vsyncadd [#allocation3], 0
      %s15 = sshll.u32 %s0, 4
      %s16 = int_to_ptr.hbm [resolvable:$true] %s15
      %s17 = sshll.u32 [#allocation2], 4
      %s18 = int_to_ptr.vmem [resolvable:$true] %s17
      %23 = dma.hbm_to_vmem [thread:$0]  %s16, 256, %s18, [#allocation3], 128, 128, 8
    $region5: #{tpu_custom_call.1} parent=1 // pred_fallthru
      _
    // Predicated region
    $region6: #{tpu_custom_call.1} parent=1 // pred_check
      _
    $region7: #{tpu_custom_call.1} parent=1 // pred_check_branch
      %25 = sbr.rel (0) target = $region9
    $region8: #{tpu_custom_call.1} parent=1 // pred_region
      %27 = vsyncadd [#allocation6], 0
      %s28 = sshll.u32 %s1, 4
      %s29 = int_to_ptr.hbm [resolvable:$true] %s28
      %s30 = sshll.u32 [#allocation5], 4
      %s31 = int_to_ptr.vmem [resolvable:$true] %s30
      %36 = dma.hbm_to_vmem [thread:$0]  %s29, 512, %s31, [#allocation6], 128, 128, 8
    $region9: #{tpu_custom_call.1} parent=1 // pred_fallthru
      _
    // Predicated region
    $region10: #{tpu_custom_call.1} parent=1 // pred_check
      _
    $region11: #{tpu_custom_call.1} parent=1 // pred_check_branch
      %38 = sbr.rel (0) target = $region13
    $region12: #{tpu_custom_call.1} parent=1 // pred_region
      %40 = vsyncadd [#allocation6], 0
      %s41 = sshll.u32 %s2, 4
      %s42 = int_to_ptr.hbm [resolvable:$true] %s41
      %s43 = sshll.u32 [#allocation7], 4
      %s44 = int_to_ptr.vmem [resolvable:$true] %s43
      %49 = dma.hbm_to_vmem [thread:$0]  %s42, 5120, %s44, [#allocation6], 128, 128, 8
    $region13: #{tpu_custom_call.1} parent=1 // pred_fallthru
      _
    // Predicated region
    $region14: #{tpu_custom_call.1} parent=1 // pred_check
      _
    $region15: #{tpu_custom_call.1} parent=1 // pred_check_branch
      %51 = sbr.rel (0) target = $region17
    $region16: #{tpu_custom_call.1} parent=1 // pred_region
      %53 = dma.done [#allocation3], 256
    $region17: #{tpu_custom_call.1} parent=1 // pred_fallthru
      _
    // Predicated region
    $region18: #{tpu_custom_call.1} parent=1 // pred_check
      _
    $region19: #{tpu_custom_call.1} parent=1 // pred_check_branch
      %55 = sbr.rel (0) target = $region21
    $region20: #{tpu_custom_call.1} parent=1 // pred_region
      %57 = dma.done [#allocation6], 512
    $region21: #{tpu_custom_call.1} parent=1 // pred_fallthru
      _
    // Predicated region
    $region22: #{tpu_custom_call.1} parent=1 // pred_check
      _
    $region23: #{tpu_custom_call.1} parent=1 // pred_check_branch
      %59 = sbr.rel (0) target = $region25
    $region24: #{tpu_custom_call.1} parent=1 // pred_region
      %61 = dma.done [#allocation6], 5120
    $region25: #{tpu_custom_call.1} parent=1 // pred_fallthru
      _
    %v62 = vld [vmem:[#allocation2] sm:$0xff]
    %v63 = vld [vmem:[#allocation2 + $0x8] sm:$0xff]
    %v64 = vld [vmem:[#allocation5] sm:$0xff]
    %v65 = vld [vmem:[#allocation5 + $0x8] sm:$0xff]
    %v66 = vld [vmem:[#allocation5 + $0x10] sm:$0xff]
    %v67 = vld [vmem:[#allocation5 + $0x18] sm:$0xff]
    %v68 = vld [vmem:[#allocation7] sm:$0x1]
    %v69 = vld [vmem:[#allocation7 + $0x1] sm:$0x1]
    %v70 = vld [vmem:[#allocation7 + $0x8] sm:$0xff]
    %v71 = vld [vmem:[#allocation7 + $0x10] sm:$0xff]
    %v72 = vld [vmem:[#allocation7 + $0x18] sm:$0xff]
    %v73 = vld [vmem:[#allocation7 + $0x20] sm:$0xff]
    %v74 = vld [vmem:[#allocation7 + $0x28] sm:$0x1]
    %v75 = vperm.slane %v74, 0
    %vm76 = vcmask 261120
    %v78 = vsel %vm76, %v62, 0
    %v81 = vsel %vm76, %v63, 0
    %83 = vmatpush.msra.mxu0 0.0
    %84 = vmatpush.msra.mxu0 0.0
    %85 = vmatpush.msra.mxu0 0.0
    %86 = vmatpush.msra.mxu0 0.0
    %87 = vmatpush.msra.mxu0 0.0
    %88 = vmatpush.msra.mxu0 0.0
    %89 = vmatpush.msra.mxu0 0.0
    %90 = vmatpush.msra.mxu0 0.0
    %91 = vmatpush.msra.mxu0 0.0
    %92 = vmatpush.msra.mxu0 0.0
    %93 = vmatpush.msra.mxu0 0.0
    %94 = vmatpush.msra.mxu0 0.0
    %95 = vmatpush.msra.mxu0 %v73
    %96 = vmatpush.msra.mxu0 %v72
    %97 = vmatpush.msra.mxu0 %v71
    %98 = vmatpush.msra.mxu0 %v70
    %99 = vmatmul.f32.gmra.mxu0 %v78
    %v100 = vpop.f32.mrf.mxu0
    %v101 = vadd.f32 %v75, %v100
    %102 = vmatmul.f32.gmra.mxu0 %v81
    %v103 = vpop.f32.mrf.mxu0
    %v104 = vadd.f32 %v75, %v103
    %105 = vdwg.mxu0
    %v106 = vld [vmem:[#allocation7 + $0x30] sm:$0xff]
    %v107 = vld [vmem:[#allocation7 + $0x38] sm:$0xff]
    %v108 = vld [vmem:[#allocation7 + $0x40] sm:$0xff]
    %v109 = vld [vmem:[#allocation7 + $0x48] sm:$0xff]
    %v110 = vld [vmem:[#allocation7 + $0x50] sm:$0x1]
    %112 = vrot.lane.b32.xlu0 %v101, 96
    %v113 = vpop.permute.xlu0 %112
    %vm114 = vcmask 64512
    %v115 = vsel %vm114, %v101, 0
    %v117 = vsel %vm114, %v113, 0
    %119 = vmatpush.xpose.msra.mxu0 0.0
    %120 = vmatpush.xpose.msra.mxu0 0.0
    %121 = vmatpush.xpose.msra.mxu0 0.0
    %122 = vmatpush.xpose.msra.mxu0 0.0
    %123 = vmatpush.xpose.msra.mxu0 0.0
    %124 = vmatpush.xpose.msra.mxu0 0.0
    %125 = vmatpush.xpose.msra.mxu0 0.0
    %126 = vmatpush.xpose.msra.mxu0 0.0
    %127 = vmatpush.xpose.msra.mxu0 0.0
    %128 = vmatpush.xpose.msra.mxu0 0.0
    %129 = vmatpush.xpose.msra.mxu0 0.0
    %130 = vmatpush.xpose.msra.mxu0 0.0
    %131 = vmatpush.xpose.msra.mxu0 0.0
    %132 = vmatpush.xpose.msra.mxu0 0.0
    %133 = vmatpush.xpose.msra.mxu0 0.0
    %134 = vmatpush.xpose.msra.mxu0 %v117
    %135 = vmatmul.f32.gmra.mxu0 %v115
    %v136 = vpop.f32.mrf.mxu0
    %v137 = vadd.f32 0.0, %v136
    %138 = vdwg.mxu0
    %139 = vrot.lane.b32.xlu0 %v101, 120
    %v140 = vpop.permute.xlu0 %139
    %141 = vrot.lane.b32.xlu0 %v101, 88
    %v142 = vpop.permute.xlu0 %141
    %v143 = vsel %vm114, %v140, 0
    %v145 = vsel %vm114, %v142, 0
    %147 = vmatpush.xpose.msra.mxu0 0.0
    %148 = vmatpush.xpose.msra.mxu0 0.0
    %149 = vmatpush.xpose.msra.mxu0 0.0
    %150 = vmatpush.xpose.msra.mxu0 0.0
    %151 = vmatpush.xpose.msra.mxu0 0.0
    %152 = vmatpush.xpose.msra.mxu0 0.0
    %153 = vmatpush.xpose.msra.mxu0 0.0
    %154 = vmatpush.xpose.msra.mxu0 0.0
    %155 = vmatpush.xpose.msra.mxu0 0.0
    %156 = vmatpush.xpose.msra.mxu0 0.0
    %157 = vmatpush.xpose.msra.mxu0 0.0
    %158 = vmatpush.xpose.msra.mxu0 0.0
    %159 = vmatpush.xpose.msra.mxu0 0.0
    %160 = vmatpush.xpose.msra.mxu0 0.0
    %161 = vmatpush.xpose.msra.mxu0 0.0
    %162 = vmatpush.xpose.msra.mxu0 %v145
    %163 = vmatmul.f32.gmra.mxu0 %v143
    %v164 = vpop.f32.mrf.mxu0
    %v165 = vadd.f32 0.0, %v164
    %166 = vdwg.mxu0
    %167 = vrot.lane.b32.xlu0 %v101, 112
    %v168 = vpop.permute.xlu0 %167
    %169 = vrot.lane.b32.xlu0 %v101, 80
    %v170 = vpop.permute.xlu0 %169
    %v171 = vsel %vm114, %v168, 0
    %v173 = vsel %vm114, %v170, 0
    %175 = vmatpush.xpose.msra.mxu0 0.0
    %176 = vmatpush.xpose.msra.mxu0 0.0
    %177 = vmatpush.xpose.msra.mxu0 0.0
    %178 = vmatpush.xpose.msra.mxu0 0.0
    %179 = vmatpush.xpose.msra.mxu0 0.0
    %180 = vmatpush.xpose.msra.mxu0 0.0
    %181 = vmatpush.xpose.msra.mxu0 0.0
    %182 = vmatpush.xpose.msra.mxu0 0.0
    %183 = vmatpush.xpose.msra.mxu0 0.0
    %184 = vmatpush.xpose.msra.mxu0 0.0
    %185 = vmatpush.xpose.msra.mxu0 0.0
    %186 = vmatpush.xpose.msra.mxu0 0.0
    %187 = vmatpush.xpose.msra.mxu0 0.0
    %188 = vmatpush.xpose.msra.mxu0 0.0
    %189 = vmatpush.xpose.msra.mxu0 0.0
    %190 = vmatpush.xpose.msra.mxu0 %v173
    %191 = vmatmul.f32.gmra.mxu0 %v171
    %v192 = vpop.f32.mrf.mxu0
    %v193 = vadd.f32 0.0, %v192
    %194 = vdwg.mxu0
    %195 = vrot.lane.b32.xlu0 %v101, 104
    %v196 = vpop.permute.xlu0 %195
    %197 = vrot.lane.b32.xlu0 %v101, 72
    %v198 = vpop.permute.xlu0 %197
    %v199 = vsel %vm114, %v196, 0
    %v201 = vsel %vm114, %v198, 0
    %203 = vmatpush.xpose.msra.mxu0 0.0
    %204 = vmatpush.xpose.msra.mxu0 0.0
    %205 = vmatpush.xpose.msra.mxu0 0.0
    %206 = vmatpush.xpose.msra.mxu0 0.0
    %207 = vmatpush.xpose.msra.mxu0 0.0
    %208 = vmatpush.xpose.msra.mxu0 0.0
    %209 = vmatpush.xpose.msra.mxu0 0.0
    %210 = vmatpush.xpose.msra.mxu0 0.0
    %211 = vmatpush.xpose.msra.mxu0 0.0
    %212 = vmatpush.xpose.msra.mxu0 0.0
    %213 = vmatpush.xpose.msra.mxu0 0.0
    %214 = vmatpush.xpose.msra.mxu0 0.0
    %215 = vmatpush.xpose.msra.mxu0 0.0
    %216 = vmatpush.xpose.msra.mxu0 0.0
    %217 = vmatpush.xpose.msra.mxu0 0.0
    %218 = vmatpush.xpose.msra.mxu0 %v201
    %219 = vmatmul.f32.gmra.mxu0 %v199
    %v220 = vpop.f32.mrf.mxu0
    %v221 = vadd.f32 0.0, %v220
    %222 = vdwg.mxu0
    %224 = vrot.lane.b32.xlu0 %v104, 96
    %v225 = vpop.permute.xlu0 %224
    %v226 = vsel %vm114, %v104, 0
    %v228 = vsel %vm114, %v225, 0
    %230 = vmatpush.xpose.msra.mxu0 0.0
    %231 = vmatpush.xpose.msra.mxu0 0.0
    %232 = vmatpush.xpose.msra.mxu0 0.0
    %233 = vmatpush.xpose.msra.mxu0 0.0
    %234 = vmatpush.xpose.msra.mxu0 0.0
    %235 = vmatpush.xpose.msra.mxu0 0.0
    %236 = vmatpush.xpose.msra.mxu0 0.0
    %237 = vmatpush.xpose.msra.mxu0 0.0
    %238 = vmatpush.xpose.msra.mxu0 0.0
    %239 = vmatpush.xpose.msra.mxu0 0.0
    %240 = vmatpush.xpose.msra.mxu0 0.0
    %241 = vmatpush.xpose.msra.mxu0 0.0
    %242 = vmatpush.xpose.msra.mxu0 0.0
    %243 = vmatpush.xpose.msra.mxu0 0.0
    %244 = vmatpush.xpose.msra.mxu0 0.0
    %245 = vmatpush.xpose.msra.mxu0 %v228
    %246 = vmatmul.f32.gmra.mxu0 %v226
    %v247 = vpop.f32.mrf.mxu0
    %v248 = vadd.f32 0.0, %v247
    %249 = vdwg.mxu0
    %250 = vrot.lane.b32.xlu0 %v104, 120
    %v251 = vpop.permute.xlu0 %250
    %252 = vrot.lane.b32.xlu0 %v104, 88
    %v253 = vpop.permute.xlu0 %252
    %v254 = vsel %vm114, %v251, 0
    %v256 = vsel %vm114, %v253, 0
    %258 = vmatpush.xpose.msra.mxu0 0.0
    %259 = vmatpush.xpose.msra.mxu0 0.0
    %260 = vmatpush.xpose.msra.mxu0 0.0
    %261 = vmatpush.xpose.msra.mxu0 0.0
    %262 = vmatpush.xpose.msra.mxu0 0.0
    %263 = vmatpush.xpose.msra.mxu0 0.0
    %264 = vmatpush.xpose.msra.mxu0 0.0
    %265 = vmatpush.xpose.msra.mxu0 0.0
    %266 = vmatpush.xpose.msra.mxu0 0.0
    %267 = vmatpush.xpose.msra.mxu0 0.0
    %268 = vmatpush.xpose.msra.mxu0 0.0
    %269 = vmatpush.xpose.msra.mxu0 0.0
    %270 = vmatpush.xpose.msra.mxu0 0.0
    %271 = vmatpush.xpose.msra.mxu0 0.0
    %272 = vmatpush.xpose.msra.mxu0 0.0
    %273 = vmatpush.xpose.msra.mxu0 %v256
    %274 = vmatmul.f32.gmra.mxu0 %v254
    %v275 = vpop.f32.mrf.mxu0
    %v276 = vadd.f32 0.0, %v275
    %277 = vdwg.mxu0
    %278 = vrot.lane.b32.xlu0 %v104, 112
    %v279 = vpop.permute.xlu0 %278
    %280 = vrot.lane.b32.xlu0 %v104, 80
    %v281 = vpop.permute.xlu0 %280
    %v282 = vsel %vm114, %v279, 0
    %v284 = vsel %vm114, %v281, 0
    %286 = vmatpush.xpose.msra.mxu0 0.0
    %287 = vmatpush.xpose.msra.mxu0 0.0
    %288 = vmatpush.xpose.msra.mxu0 0.0
    %289 = vmatpush.xpose.msra.mxu0 0.0
    %290 = vmatpush.xpose.msra.mxu0 0.0
    %291 = vmatpush.xpose.msra.mxu0 0.0
    %292 = vmatpush.xpose.msra.mxu0 0.0
    %293 = vmatpush.xpose.msra.mxu0 0.0
    %294 = vmatpush.xpose.msra.mxu0 0.0
    %295 = vmatpush.xpose.msra.mxu0 0.0
    %296 = vmatpush.xpose.msra.mxu0 0.0
    %297 = vmatpush.xpose.msra.mxu0 0.0
    %298 = vmatpush.xpose.msra.mxu0 0.0
    %299 = vmatpush.xpose.msra.mxu0 0.0
    %300 = vmatpush.xpose.msra.mxu0 0.0
    %301 = vmatpush.xpose.msra.mxu0 %v284
    %302 = vmatmul.f32.gmra.mxu0 %v282
    %v303 = vpop.f32.mrf.mxu0
    %v304 = vadd.f32 0.0, %v303
    %305 = vdwg.mxu0
    %306 = vrot.lane.b32.xlu0 %v104, 104
    %v307 = vpop.permute.xlu0 %306
    %308 = vrot.lane.b32.xlu0 %v104, 72
    %v309 = vpop.permute.xlu0 %308
    %v310 = vsel %vm114, %v307, 0
    %v312 = vsel %vm114, %v309, 0
    %314 = vmatpush.xpose.msra.mxu0 0.0
    %315 = vmatpush.xpose.msra.mxu0 0.0
    %316 = vmatpush.xpose.msra.mxu0 0.0
    %317 = vmatpush.xpose.msra.mxu0 0.0
    %318 = vmatpush.xpose.msra.mxu0 0.0
    %319 = vmatpush.xpose.msra.mxu0 0.0
    %320 = vmatpush.xpose.msra.mxu0 0.0
    %321 = vmatpush.xpose.msra.mxu0 0.0
    %322 = vmatpush.xpose.msra.mxu0 0.0
    %323 = vmatpush.xpose.msra.mxu0 0.0
    %324 = vmatpush.xpose.msra.mxu0 0.0
    %325 = vmatpush.xpose.msra.mxu0 0.0
    %326 = vmatpush.xpose.msra.mxu0 0.0
    %327 = vmatpush.xpose.msra.mxu0 0.0
    %328 = vmatpush.xpose.msra.mxu0 0.0
    %329 = vmatpush.xpose.msra.mxu0 %v312
    %330 = vmatmul.f32.gmra.mxu0 %v310
    %v331 = vpop.f32.mrf.mxu0
    %v332 = vadd.f32 0.0, %v331
    %333 = vdwg.mxu0
    %v334 = vsel %vm114, %v137, -inf
    %335 = vmax.xlane.f32.xlu0 %v334
    %v336 = vpop.xlane.xlu0 %335
    %v337 = vsel %vm114, %v165, -inf
    %338 = vmax.xlane.f32.xlu0 %v337
    %v339 = vpop.xlane.xlu0 %338
    %v340 = vsel %vm114, %v193, -inf
    %341 = vmax.xlane.f32.xlu0 %v340
    %v342 = vpop.xlane.xlu0 %341
    %v343 = vsel %vm114, %v221, -inf
    %344 = vmax.xlane.f32.xlu0 %v343
    %v345 = vpop.xlane.xlu0 %344
    %v346 = vsel %vm114, %v248, -inf
    %347 = vmax.xlane.f32.xlu0 %v346
    %v348 = vpop.xlane.xlu0 %347
    %v349 = vsel %vm114, %v276, -inf
    %350 = vmax.xlane.f32.xlu0 %v349
    %v351 = vpop.xlane.xlu0 %350
    %v352 = vsel %vm114, %v304, -inf
    %353 = vmax.xlane.f32.xlu0 %v352
    %v354 = vpop.xlane.xlu0 %353
    %v355 = vsel %vm114, %v332, -inf
    %356 = vmax.xlane.f32.xlu0 %v355
    %v357 = vpop.xlane.xlu0 %356
    %v358 = vsub.f32 %v137, %v336
    %v359 = vsub.f32 %v165, %v339
    %v360 = vsub.f32 %v193, %v342
    %v361 = vsub.f32 %v221, %v345
    %v362 = vsub.f32 %v248, %v348
    %v363 = vsub.f32 %v276, %v351
    %v364 = vsub.f32 %v304, %v354
    %v365 = vsub.f32 %v332, %v357
    %v366 = vmul.f32 %v358, 1.442695
    %v367 = vpow.pop %v366
    %v368 = vmul.f32 %v359, 1.442695
    %v369 = vpow.pop %v368
    %v370 = vmul.f32 %v360, 1.442695
    %v371 = vpow.pop %v370
    %v372 = vmul.f32 %v361, 1.442695
    %v373 = vpow.pop %v372
    %v374 = vmul.f32 %v362, 1.442695
    %v375 = vpow.pop %v374
    %v376 = vmul.f32 %v363, 1.442695
    %v377 = vpow.pop %v376
    %v378 = vmul.f32 %v364, 1.442695
    %v379 = vpow.pop %v378
    %v380 = vmul.f32 %v365, 1.442695
    %v381 = vpow.pop %v380
    %v382 = vsel %vm114, %v367, 0.0
    %383 = vadd.xlane.f32.xlu0 %v382
    %v384 = vpop.xlane.xlu0 %383
    %v385 = vsel %vm114, %v369, 0.0
    %386 = vadd.xlane.f32.xlu0 %v385
    %v387 = vpop.xlane.xlu0 %386
    %v388 = vsel %vm114, %v371, 0.0
    %389 = vadd.xlane.f32.xlu0 %v388
    %v390 = vpop.xlane.xlu0 %389
    %v391 = vsel %vm114, %v373, 0.0
    %392 = vadd.xlane.f32.xlu0 %v391
    %v393 = vpop.xlane.xlu0 %392
    %v394 = vsel %vm114, %v375, 0.0
    %395 = vadd.xlane.f32.xlu0 %v394
    %v396 = vpop.xlane.xlu0 %395
    %v397 = vsel %vm114, %v377, 0.0
    %398 = vadd.xlane.f32.xlu0 %v397
    %v399 = vpop.xlane.xlu0 %398
    %v400 = vsel %vm114, %v379, 0.0
    %401 = vadd.xlane.f32.xlu0 %v400
    %v402 = vpop.xlane.xlu0 %401
    %v403 = vsel %vm114, %v381, 0.0
    %404 = vadd.xlane.f32.xlu0 %v403
    %v405 = vpop.xlane.xlu0 %404
    %v406 = vrcp.pop %v384
    %v407 = vrcp.pop %v387
    %v408 = vrcp.pop %v390
    %v409 = vrcp.pop %v393
    %v410 = vrcp.pop %v396
    %v411 = vrcp.pop %v399
    %v412 = vrcp.pop %v402
    %v413 = vrcp.pop %v405
    %v414 = vmul.f32 %v384, %v406
    %v415 = vmul.f32 %v387, %v407
    %v416 = vmul.f32 %v390, %v408
    %v417 = vmul.f32 %v393, %v409
    %v418 = vmul.f32 %v396, %v410
    %v419 = vmul.f32 %v399, %v411
    %v420 = vmul.f32 %v402, %v412
    %v421 = vmul.f32 %v405, %v413
    %v422 = vsub.f32 2.0, %v414
    %v423 = vsub.f32 2.0, %v415
    %v424 = vsub.f32 2.0, %v416
    %v425 = vsub.f32 2.0, %v417
    %v426 = vsub.f32 2.0, %v418
    %v427 = vsub.f32 2.0, %v419
    %v428 = vsub.f32 2.0, %v420
    %v429 = vsub.f32 2.0, %v421
    %v430 = vmul.f32 %v406, %v422
    %v431 = vmul.f32 %v407, %v423
    %v432 = vmul.f32 %v408, %v424
    %v433 = vmul.f32 %v409, %v425
    %v434 = vmul.f32 %v410, %v426
    %v435 = vmul.f32 %v411, %v427
    %v436 = vmul.f32 %v412, %v428
    %v437 = vmul.f32 %v413, %v429
    %438 = vrot.lane.b32.xlu0 %v101, 64
    %v439 = vpop.permute.xlu0 %438
    %v442 = vsel %vm114, %v367, 0
    %444 = vmatpush.msra.mxu0 0.0
    %445 = vmatpush.msra.mxu0 0.0
    %446 = vmatpush.msra.mxu0 0.0
    %447 = vmatpush.msra.mxu0 0.0
    %448 = vmatpush.msra.mxu0 0.0
    %449 = vmatpush.msra.mxu0 0.0
    %450 = vmatpush.msra.mxu0 0.0
    %451 = vmatpush.msra.mxu0 0.0
    %452 = vmatpush.msra.mxu0 0.0
    %453 = vmatpush.msra.mxu0 0.0
    %454 = vmatpush.msra.mxu0 0.0
    %455 = vmatpush.msra.mxu0 0.0
    %456 = vmatpush.msra.mxu0 0.0
    %457 = vmatpush.msra.mxu0 0.0
    %458 = vmatpush.msra.mxu0 0.0
    %459 = vmatpush.msra.mxu0 %v439
    %460 = vmatmul.f32.gmra.mxu0 %v442
    %v461 = vpop.f32.mrf.mxu0
    %v462 = vadd.f32 0.0, %v461
    %463 = vdwg.mxu0
    %v464 = vmul.f32 %v462, %v430
    %465 = vrot.lane.b32.xlu0 %v101, 56
    %v466 = vpop.permute.xlu0 %465
    %v469 = vsel %vm114, %v369, 0
    %471 = vmatpush.msra.mxu0 0.0
    %472 = vmatpush.msra.mxu0 0.0
    %473 = vmatpush.msra.mxu0 0.0
    %474 = vmatpush.msra.mxu0 0.0
    %475 = vmatpush.msra.mxu0 0.0
    %476 = vmatpush.msra.mxu0 0.0
    %477 = vmatpush.msra.mxu0 0.0
    %478 = vmatpush.msra.mxu0 0.0
    %479 = vmatpush.msra.mxu0 0.0
    %480 = vmatpush.msra.mxu0 0.0
    %481 = vmatpush.msra.mxu0 0.0
    %482 = vmatpush.msra.mxu0 0.0
    %483 = vmatpush.msra.mxu0 0.0
    %484 = vmatpush.msra.mxu0 0.0
    %485 = vmatpush.msra.mxu0 0.0
    %486 = vmatpush.msra.mxu0 %v466
    %487 = vmatmul.f32.gmra.mxu0 %v469
    %v488 = vpop.f32.mrf.mxu0
    %v489 = vadd.f32 0.0, %v488
    %490 = vdwg.mxu0
    %v491 = vmul.f32 %v489, %v431
    %v493 = vsel %vm114, %v491, 0
    %495 = vmatpush.msra.mxu0 0.0
    %496 = vmatpush.msra.mxu0 0.0
    %497 = vmatpush.msra.mxu0 0.0
    %498 = vmatpush.msra.mxu0 0.0
    %499 = vmatpush.msra.mxu0 0.0
    %500 = vmatpush.msra.mxu0 0.0
    %501 = vmatpush.msra.mxu0 0.0
    %502 = vmatpush.msra.mxu0 0.0
    %503 = vmatpush.msra.mxu0 0.0
    %504 = vmatpush.msra.mxu0 0.0
    %505 = vmatpush.msra.mxu0 0.0
    %506 = vmatpush.msra.mxu0 0.0
    %507 = vmatpush.msra.mxu0 0.0
    %508 = vmatpush.msra.mxu0 0.0
    %509 = vmatpush.msra.mxu0 0.0
    %510 = vmatpush.msra.mxu0 %v107
    %511 = vmatmul.f32.gmra.mxu0 %v493
    %v512 = vpop.f32.mrf.mxu0
    %v513 = vadd.f32 0.0, %v512
    %514 = vdwg.mxu0
    %v516 = vsel %vm114, %v464, 0
    %518 = vmatpush.msra.mxu0 0.0
    %519 = vmatpush.msra.mxu0 0.0
    %520 = vmatpush.msra.mxu0 0.0
    %521 = vmatpush.msra.mxu0 0.0
    %522 = vmatpush.msra.mxu0 0.0
    %523 = vmatpush.msra.mxu0 0.0
    %524 = vmatpush.msra.mxu0 0.0
    %525 = vmatpush.msra.mxu0 0.0
    %526 = vmatpush.msra.mxu0 0.0
    %527 = vmatpush.msra.mxu0 0.0
    %528 = vmatpush.msra.mxu0 0.0
    %529 = vmatpush.msra.mxu0 0.0
    %530 = vmatpush.msra.mxu0 0.0
    %531 = vmatpush.msra.mxu0 0.0
    %532 = vmatpush.msra.mxu0 0.0
    %533 = vmatpush.msra.mxu0 %v106
    %534 = vmatmul.f32.gmra.mxu0 %v516
    %v535 = vpop.f32.mrf.mxu0
    %v536 = vadd.f32 %v513, %v535
    %537 = vdwg.mxu0
    %538 = vrot.lane.b32.xlu0 %v101, 48
    %v539 = vpop.permute.xlu0 %538
    %v542 = vsel %vm114, %v371, 0
    %544 = vmatpush.msra.mxu0 0.0
    %545 = vmatpush.msra.mxu0 0.0
    %546 = vmatpush.msra.mxu0 0.0
    %547 = vmatpush.msra.mxu0 0.0
    %548 = vmatpush.msra.mxu0 0.0
    %549 = vmatpush.msra.mxu0 0.0
    %550 = vmatpush.msra.mxu0 0.0
    %551 = vmatpush.msra.mxu0 0.0
    %552 = vmatpush.msra.mxu0 0.0
    %553 = vmatpush.msra.mxu0 0.0
    %554 = vmatpush.msra.mxu0 0.0
    %555 = vmatpush.msra.mxu0 0.0
    %556 = vmatpush.msra.mxu0 0.0
    %557 = vmatpush.msra.mxu0 0.0
    %558 = vmatpush.msra.mxu0 0.0
    %559 = vmatpush.msra.mxu0 %v539
    %560 = vmatmul.f32.gmra.mxu0 %v542
    %v561 = vpop.f32.mrf.mxu0
    %v562 = vadd.f32 0.0, %v561
    %563 = vdwg.mxu0
    %v564 = vmul.f32 %v562, %v432
    %v566 = vsel %vm114, %v564, 0
    %568 = vmatpush.msra.mxu0 0.0
    %569 = vmatpush.msra.mxu0 0.0
    %570 = vmatpush.msra.mxu0 0.0
    %571 = vmatpush.msra.mxu0 0.0
    %572 = vmatpush.msra.mxu0 0.0
    %573 = vmatpush.msra.mxu0 0.0
    %574 = vmatpush.msra.mxu0 0.0
    %575 = vmatpush.msra.mxu0 0.0
    %576 = vmatpush.msra.mxu0 0.0
    %577 = vmatpush.msra.mxu0 0.0
    %578 = vmatpush.msra.mxu0 0.0
    %579 = vmatpush.msra.mxu0 0.0
    %580 = vmatpush.msra.mxu0 0.0
    %581 = vmatpush.msra.mxu0 0.0
    %582 = vmatpush.msra.mxu0 0.0
    %583 = vmatpush.msra.mxu0 %v108
    %584 = vmatmul.f32.gmra.mxu0 %v566
    %v585 = vpop.f32.mrf.mxu0
    %v586 = vadd.f32 0.0, %v585
    %587 = vdwg.mxu0
    %v588 = vadd.f32 %v536, %v586
    %589 = vrot.lane.b32.xlu0 %v101, 40
    %v590 = vpop.permute.xlu0 %589
    %v593 = vsel %vm114, %v373, 0
    %595 = vmatpush.msra.mxu0 0.0
    %596 = vmatpush.msra.mxu0 0.0
    %597 = vmatpush.msra.mxu0 0.0
    %598 = vmatpush.msra.mxu0 0.0
    %599 = vmatpush.msra.mxu0 0.0
    %600 = vmatpush.msra.mxu0 0.0
    %601 = vmatpush.msra.mxu0 0.0
    %602 = vmatpush.msra.mxu0 0.0
    %603 = vmatpush.msra.mxu0 0.0
    %604 = vmatpush.msra.mxu0 0.0
    %605 = vmatpush.msra.mxu0 0.0
    %606 = vmatpush.msra.mxu0 0.0
    %607 = vmatpush.msra.mxu0 0.0
    %608 = vmatpush.msra.mxu0 0.0
    %609 = vmatpush.msra.mxu0 0.0
    %610 = vmatpush.msra.mxu0 %v590
    %611 = vmatmul.f32.gmra.mxu0 %v593
    %v612 = vpop.f32.mrf.mxu0
    %v613 = vadd.f32 0.0, %v612
    %614 = vdwg.mxu0
    %v615 = vmul.f32 %v613, %v433
    %v617 = vsel %vm114, %v615, 0
    %619 = vmatpush.msra.mxu0 0.0
    %620 = vmatpush.msra.mxu0 0.0
    %621 = vmatpush.msra.mxu0 0.0
    %622 = vmatpush.msra.mxu0 0.0
    %623 = vmatpush.msra.mxu0 0.0
    %624 = vmatpush.msra.mxu0 0.0
    %625 = vmatpush.msra.mxu0 0.0
    %626 = vmatpush.msra.mxu0 0.0
    %627 = vmatpush.msra.mxu0 0.0
    %628 = vmatpush.msra.mxu0 0.0
    %629 = vmatpush.msra.mxu0 0.0
    %630 = vmatpush.msra.mxu0 0.0
    %631 = vmatpush.msra.mxu0 0.0
    %632 = vmatpush.msra.mxu0 0.0
    %633 = vmatpush.msra.mxu0 0.0
    %634 = vmatpush.msra.mxu0 %v109
    %635 = vmatmul.f32.gmra.mxu0 %v617
    %v636 = vpop.f32.mrf.mxu0
    %v637 = vadd.f32 0.0, %v636
    %638 = vdwg.mxu0
    %v639 = vadd.f32 %v588, %v637
    %640 = vrot.lane.b32.xlu0 %v104, 64
    %v641 = vpop.permute.xlu0 %640
    %v644 = vsel %vm114, %v375, 0
    %646 = vmatpush.msra.mxu0 0.0
    %647 = vmatpush.msra.mxu0 0.0
    %648 = vmatpush.msra.mxu0 0.0
    %649 = vmatpush.msra.mxu0 0.0
    %650 = vmatpush.msra.mxu0 0.0
    %651 = vmatpush.msra.mxu0 0.0
    %652 = vmatpush.msra.mxu0 0.0
    %653 = vmatpush.msra.mxu0 0.0
    %654 = vmatpush.msra.mxu0 0.0
    %655 = vmatpush.msra.mxu0 0.0
    %656 = vmatpush.msra.mxu0 0.0
    %657 = vmatpush.msra.mxu0 0.0
    %658 = vmatpush.msra.mxu0 0.0
    %659 = vmatpush.msra.mxu0 0.0
    %660 = vmatpush.msra.mxu0 0.0
    %661 = vmatpush.msra.mxu0 %v641
    %662 = vmatmul.f32.gmra.mxu0 %v644
    %v663 = vpop.f32.mrf.mxu0
    %v664 = vadd.f32 0.0, %v663
    %665 = vdwg.mxu0
    %v666 = vmul.f32 %v664, %v434
    %667 = vrot.lane.b32.xlu0 %v104, 56
    %v668 = vpop.permute.xlu0 %667
    %v671 = vsel %vm114, %v377, 0
    %673 = vmatpush.msra.mxu0 0.0
    %674 = vmatpush.msra.mxu0 0.0
    %675 = vmatpush.msra.mxu0 0.0
    %676 = vmatpush.msra.mxu0 0.0
    %677 = vmatpush.msra.mxu0 0.0
    %678 = vmatpush.msra.mxu0 0.0
    %679 = vmatpush.msra.mxu0 0.0
    %680 = vmatpush.msra.mxu0 0.0
    %681 = vmatpush.msra.mxu0 0.0
    %682 = vmatpush.msra.mxu0 0.0
    %683 = vmatpush.msra.mxu0 0.0
    %684 = vmatpush.msra.mxu0 0.0
    %685 = vmatpush.msra.mxu0 0.0
    %686 = vmatpush.msra.mxu0 0.0
    %687 = vmatpush.msra.mxu0 0.0
    %688 = vmatpush.msra.mxu0 %v668
    %689 = vmatmul.f32.gmra.mxu0 %v671
    %v690 = vpop.f32.mrf.mxu0
    %v691 = vadd.f32 0.0, %v690
    %692 = vdwg.mxu0
    %v693 = vmul.f32 %v691, %v435
    %v695 = vsel %vm114, %v693, 0
    %697 = vmatpush.msra.mxu0 0.0
    %698 = vmatpush.msra.mxu0 0.0
    %699 = vmatpush.msra.mxu0 0.0
    %700 = vmatpush.msra.mxu0 0.0
    %701 = vmatpush.msra.mxu0 0.0
    %702 = vmatpush.msra.mxu0 0.0
    %703 = vmatpush.msra.mxu0 0.0
    %704 = vmatpush.msra.mxu0 0.0
    %705 = vmatpush.msra.mxu0 0.0
    %706 = vmatpush.msra.mxu0 0.0
    %707 = vmatpush.msra.mxu0 0.0
    %708 = vmatpush.msra.mxu0 0.0
    %709 = vmatpush.msra.mxu0 0.0
    %710 = vmatpush.msra.mxu0 0.0
    %711 = vmatpush.msra.mxu0 0.0
    %712 = vmatpush.msra.mxu0 %v107
    %713 = vmatmul.f32.gmra.mxu0 %v695
    %v714 = vpop.f32.mrf.mxu0
    %v715 = vadd.f32 0.0, %v714
    %716 = vdwg.mxu0
    %v718 = vsel %vm114, %v666, 0
    %720 = vmatpush.msra.mxu0 0.0
    %721 = vmatpush.msra.mxu0 0.0
    %722 = vmatpush.msra.mxu0 0.0
    %723 = vmatpush.msra.mxu0 0.0
    %724 = vmatpush.msra.mxu0 0.0
    %725 = vmatpush.msra.mxu0 0.0
    %726 = vmatpush.msra.mxu0 0.0
    %727 = vmatpush.msra.mxu0 0.0
    %728 = vmatpush.msra.mxu0 0.0
    %729 = vmatpush.msra.mxu0 0.0
    %730 = vmatpush.msra.mxu0 0.0
    %731 = vmatpush.msra.mxu0 0.0
    %732 = vmatpush.msra.mxu0 0.0
    %733 = vmatpush.msra.mxu0 0.0
    %734 = vmatpush.msra.mxu0 0.0
    %735 = vmatpush.msra.mxu0 %v106
    %736 = vmatmul.f32.gmra.mxu0 %v718
    %v737 = vpop.f32.mrf.mxu0
    %v738 = vadd.f32 %v715, %v737
    %739 = vdwg.mxu0
    %740 = vrot.lane.b32.xlu0 %v104, 48
    %v741 = vpop.permute.xlu0 %740
    %v744 = vsel %vm114, %v379, 0
    %746 = vmatpush.msra.mxu0 0.0
    %747 = vmatpush.msra.mxu0 0.0
    %748 = vmatpush.msra.mxu0 0.0
    %749 = vmatpush.msra.mxu0 0.0
    %750 = vmatpush.msra.mxu0 0.0
    %751 = vmatpush.msra.mxu0 0.0
    %752 = vmatpush.msra.mxu0 0.0
    %753 = vmatpush.msra.mxu0 0.0
    %754 = vmatpush.msra.mxu0 0.0
    %755 = vmatpush.msra.mxu0 0.0
    %756 = vmatpush.msra.mxu0 0.0
    %757 = vmatpush.msra.mxu0 0.0
    %758 = vmatpush.msra.mxu0 0.0
    %759 = vmatpush.msra.mxu0 0.0
    %760 = vmatpush.msra.mxu0 0.0
    %761 = vmatpush.msra.mxu0 %v741
    %762 = vmatmul.f32.gmra.mxu0 %v744
    %v763 = vpop.f32.mrf.mxu0
    %v764 = vadd.f32 0.0, %v763
    %765 = vdwg.mxu0
    %v766 = vmul.f32 %v764, %v436
    %v768 = vsel %vm114, %v766, 0
    %770 = vmatpush.msra.mxu0 0.0
    %771 = vmatpush.msra.mxu0 0.0
    %772 = vmatpush.msra.mxu0 0.0
    %773 = vmatpush.msra.mxu0 0.0
    %774 = vmatpush.msra.mxu0 0.0
    %775 = vmatpush.msra.mxu0 0.0
    %776 = vmatpush.msra.mxu0 0.0
    %777 = vmatpush.msra.mxu0 0.0
    %778 = vmatpush.msra.mxu0 0.0
    %779 = vmatpush.msra.mxu0 0.0
    %780 = vmatpush.msra.mxu0 0.0
    %781 = vmatpush.msra.mxu0 0.0
    %782 = vmatpush.msra.mxu0 0.0
    %783 = vmatpush.msra.mxu0 0.0
    %784 = vmatpush.msra.mxu0 0.0
    %785 = vmatpush.msra.mxu0 %v108
    %786 = vmatmul.f32.gmra.mxu0 %v768
    %v787 = vpop.f32.mrf.mxu0
    %v788 = vadd.f32 0.0, %v787
    %789 = vdwg.mxu0
    %v790 = vadd.f32 %v738, %v788
    %791 = vrot.lane.b32.xlu0 %v104, 40
    %v792 = vpop.permute.xlu0 %791
    %v795 = vsel %vm114, %v381, 0
    %797 = vmatpush.msra.mxu0 0.0
    %798 = vmatpush.msra.mxu0 0.0
    %799 = vmatpush.msra.mxu0 0.0
    %800 = vmatpush.msra.mxu0 0.0
    %801 = vmatpush.msra.mxu0 0.0
    %802 = vmatpush.msra.mxu0 0.0
    %803 = vmatpush.msra.mxu0 0.0
    %804 = vmatpush.msra.mxu0 0.0
    %805 = vmatpush.msra.mxu0 0.0
    %806 = vmatpush.msra.mxu0 0.0
    %807 = vmatpush.msra.mxu0 0.0
    %808 = vmatpush.msra.mxu0 0.0
    %809 = vmatpush.msra.mxu0 0.0
    %810 = vmatpush.msra.mxu0 0.0
    %811 = vmatpush.msra.mxu0 0.0
    %812 = vmatpush.msra.mxu0 %v792
    %813 = vmatmul.f32.gmra.mxu0 %v795
    %v814 = vpop.f32.mrf.mxu0
    %v815 = vadd.f32 0.0, %v814
    %816 = vdwg.mxu0
    %v817 = vmul.f32 %v815, %v437
    %v819 = vsel %vm114, %v817, 0
    %821 = vmatpush.msra.mxu0 0.0
    %822 = vmatpush.msra.mxu0 0.0
    %823 = vmatpush.msra.mxu0 0.0
    %824 = vmatpush.msra.mxu0 0.0
    %825 = vmatpush.msra.mxu0 0.0
    %826 = vmatpush.msra.mxu0 0.0
    %827 = vmatpush.msra.mxu0 0.0
    %828 = vmatpush.msra.mxu0 0.0
    %829 = vmatpush.msra.mxu0 0.0
    %830 = vmatpush.msra.mxu0 0.0
    %831 = vmatpush.msra.mxu0 0.0
    %832 = vmatpush.msra.mxu0 0.0
    %833 = vmatpush.msra.mxu0 0.0
    %834 = vmatpush.msra.mxu0 0.0
    %835 = vmatpush.msra.mxu0 0.0
    %836 = vmatpush.msra.mxu0 %v109
    %837 = vmatmul.f32.gmra.mxu0 %v819
    %v838 = vpop.f32.mrf.mxu0
    %v839 = vadd.f32 0.0, %v838
    %840 = vdwg.mxu0
    %v841 = vadd.f32 %v790, %v839
    %v842 = vperm.slane %v110, 0
    %v843 = vadd.f32 %v639, %v842
    %v844 = vadd.f32 %v841, %v842
    %v845 = vadd.f32 %v62, %v843
    %v846 = vadd.f32 %v63, %v844
    %v847 = vsel %vm76, %v845, 0.0
    %848 = vadd.xlane.f32.xlu0 %v847
    %v849 = vpop.xlane.xlu0 %848
    %v850 = vsel %vm76, %v846, 0.0
    %851 = vadd.xlane.f32.xlu0 %v850
    %v852 = vpop.xlane.xlu0 %851
    %v853 = vrcp.pop 32.0
    %v854 = vmul.f32 32.0, %v853
    %v855 = vsub.f32 1.0, %v854
    %v856 = vmul.f32 %v853, %v855
    %v857 = vadd.f32 %v853, %v856
    %vm858 = vweird.f32 %v853
    %v859 = vsel %vm858, %v853, %v857
    %v860 = vmul.f32 %v849, %v859
    %v861 = vmul.f32 %v852, %v859
    %v862 = vmul.f32 %v845, %v845
    %v863 = vmul.f32 %v846, %v846
    %v864 = vsel %vm76, %v862, 0.0
    %865 = vadd.xlane.f32.xlu0 %v864
    %v866 = vpop.xlane.xlu0 %865
    %v867 = vsel %vm76, %v863, 0.0
    %868 = vadd.xlane.f32.xlu0 %v867
    %v869 = vpop.xlane.xlu0 %868
    %v870 = vmul.f32 %v866, %v859
    %v871 = vmul.f32 %v869, %v859
    %v872 = vsub.f32 %v845, %v860
    %v873 = vsub.f32 %v846, %v861
    %v874 = vmul.f32 %v860, %v860
    %v875 = vmul.f32 %v861, %v861
    %v876 = vsub.f32 %v870, %v874
    %v877 = vsub.f32 %v871, %v875
    %v878 = vadd.f32 %v876, 1e-05
    %v879 = vadd.f32 %v877, 1e-05
    %v880 = vrsqrt.pop %v878
    %v881 = vmul.f32 %v880, %v878
    %v882 = vmul.f32 %v881, %v880
    %v883 = vmul.f32 0.5, %v882
    %v884 = vsub.f32 1.5, %v883
    %v885 = vmul.f32 %v880, %v884
    %vm886 = vweird.f32 %v878
    %vm887 = vweird.f32 %v880
    %vm888 = vmor %vm886, %vm887
    %v889 = vsel %vm888, %v880, %v885
    %v890 = vrsqrt.pop %v879
    %v891 = vmul.f32 %v890, %v879
    %v892 = vmul.f32 %v891, %v890
    %v893 = vmul.f32 0.5, %v892
    %v894 = vsub.f32 1.5, %v893
    %v895 = vmul.f32 %v890, %v894
    %vm896 = vweird.f32 %v879
    %vm897 = vweird.f32 %v890
    %vm898 = vmor %vm896, %vm897
    %v899 = vsel %vm898, %v890, %v895
    %v900 = vmul.f32 %v872, %v889
    %v901 = vmul.f32 %v873, %v899
    %v902 = vperm.slane %v68, 0
    %v903 = vmul.f32 %v900, %v902
    %v904 = vmul.f32 %v901, %v902
    %v905 = vperm.slane %v69, 0
    %v906 = vadd.f32 %v903, %v905
    %v907 = vadd.f32 %v904, %v905
    %v908 = vld [vmem:[#allocation7 + $0x58] sm:$0xff]
    %v909 = vld [vmem:[#allocation7 + $0x60] sm:$0xff]
    %v910 = vld [vmem:[#allocation7 + $0x68] sm:$0xff]
    %v911 = vld [vmem:[#allocation7 + $0x70] sm:$0xff]
    %v912 = vld [vmem:[#allocation7 + $0x78] sm:$0x1]
    %v913 = vperm.slane %v912, 0
    %v915 = vsel %vm76, %v906, 0
    %v918 = vsel %vm76, %v907, 0
    %920 = vmatpush.msra.mxu0 0.0
    %921 = vmatpush.msra.mxu0 0.0
    %922 = vmatpush.msra.mxu0 0.0
    %923 = vmatpush.msra.mxu0 0.0
    %924 = vmatpush.msra.mxu0 0.0
    %925 = vmatpush.msra.mxu0 0.0
    %926 = vmatpush.msra.mxu0 0.0
    %927 = vmatpush.msra.mxu0 0.0
    %928 = vmatpush.msra.mxu0 0.0
    %929 = vmatpush.msra.mxu0 0.0
    %930 = vmatpush.msra.mxu0 0.0
    %931 = vmatpush.msra.mxu0 0.0
    %932 = vmatpush.msra.mxu0 %v911
    %933 = vmatpush.msra.mxu0 %v910
    %934 = vmatpush.msra.mxu0 %v909
    %935 = vmatpush.msra.mxu0 %v908
    %936 = vmatmul.f32.gmra.mxu0 %v915
    %v937 = vpop.f32.mrf.mxu0
    %v938 = vadd.f32 %v913, %v937
    %939 = vmatmul.f32.gmra.mxu0 %v918
    %v940 = vpop.f32.mrf.mxu0
    %v941 = vadd.f32 %v913, %v940
    %942 = vdwg.mxu0
    %v943 = vld [vmem:[#allocation7 + $0x80] sm:$0xff]
    %v944 = vld [vmem:[#allocation7 + $0x88] sm:$0xff]
    %v945 = vld [vmem:[#allocation7 + $0x90] sm:$0xff]
    %v946 = vld [vmem:[#allocation7 + $0x98] sm:$0xff]
    %v947 = vld [vmem:[#allocation7 + $0xa0] sm:$0x1]
    %v948 = vperm.slane %v947, 0
    %v950 = vsel %vm76, %v64, 0
    %v953 = vsel %vm76, %v65, 0
    %v956 = vsel %vm76, %v66, 0
    %v959 = vsel %vm76, %v67, 0
    %961 = vmatpush.msra.mxu0 0.0
    %962 = vmatpush.msra.mxu0 0.0
    %963 = vmatpush.msra.mxu0 0.0
    %964 = vmatpush.msra.mxu0 0.0
    %965 = vmatpush.msra.mxu0 0.0
    %966 = vmatpush.msra.mxu0 0.0
    %967 = vmatpush.msra.mxu0 0.0
    %968 = vmatpush.msra.mxu0 0.0
    %969 = vmatpush.msra.mxu0 0.0
    %970 = vmatpush.msra.mxu0 0.0
    %971 = vmatpush.msra.mxu0 0.0
    %972 = vmatpush.msra.mxu0 0.0
    %973 = vmatpush.msra.mxu0 %v946
    %974 = vmatpush.msra.mxu0 %v945
    %975 = vmatpush.msra.mxu0 %v944
    %976 = vmatpush.msra.mxu0 %v943
    %977 = vmatmul.f32.gmra.mxu0 %v950
    %v978 = vpop.f32.mrf.mxu0
    %v979 = vadd.f32 %v948, %v978
    %980 = vmatmul.f32.gmra.mxu0 %v953
    %v981 = vpop.f32.mrf.mxu0
    %v982 = vadd.f32 %v948, %v981
    %983 = vmatmul.f32.gmra.mxu0 %v956
    %v984 = vpop.f32.mrf.mxu0
    %v985 = vadd.f32 %v948, %v984
    %986 = vmatmul.f32.gmra.mxu0 %v959
    %v987 = vpop.f32.mrf.mxu0
    %v988 = vadd.f32 %v948, %v987
    %989 = vdwg.mxu0
    %v990 = vld [vmem:[#allocation7 + $0xa8] sm:$0xff]
    %v991 = vld [vmem:[#allocation7 + $0xb0] sm:$0xff]
    %v992 = vld [vmem:[#allocation7 + $0xb8] sm:$0xff]
    %v993 = vld [vmem:[#allocation7 + $0xc0] sm:$0xff]
    %v994 = vld [vmem:[#allocation7 + $0xc8] sm:$0x1]
    %v996 = vsel %vm114, %v938, 0
    %v999 = vsel %vm114, %v979, 0
    %v1002 = vsel %vm114, %v982, 0
    %1004 = vmatpush.xpose.msra.mxu0 0.0
    %1005 = vmatpush.xpose.msra.mxu0 0.0
    %1006 = vmatpush.xpose.msra.mxu0 0.0
    %1007 = vmatpush.xpose.msra.mxu0 0.0
    %1008 = vmatpush.xpose.msra.mxu0 0.0
    %1009 = vmatpush.xpose.msra.mxu0 0.0
    %1010 = vmatpush.xpose.msra.mxu0 0.0
    %1011 = vmatpush.xpose.msra.mxu0 0.0
    %1012 = vmatpush.xpose.msra.mxu0 0.0
    %1013 = vmatpush.xpose.msra.mxu0 0.0
    %1014 = vmatpush.xpose.msra.mxu0 0.0
    %1015 = vmatpush.xpose.msra.mxu0 0.0
    %1016 = vmatpush.xpose.msra.mxu0 0.0
    %1017 = vmatpush.xpose.msra.mxu0 0.0
    %1018 = vmatpush.xpose.msra.mxu0 %v1002
    %1019 = vmatpush.xpose.msra.mxu0 %v999
    %1020 = vmatmul.f32.gmra.mxu0 %v996
    %v1021 = vpop.f32.mrf.mxu0
    %v1022 = vadd.f32 0.0, %v1021
    %1023 = vdwg.mxu0
    %1024 = vrot.lane.b32.xlu0 %v938, 120
    %v1025 = vpop.permute.xlu0 %1024
    %1026 = vrot.lane.b32.xlu0 %v979, 120
    %v1027 = vpop.permute.xlu0 %1026
    %1028 = vrot.lane.b32.xlu0 %v982, 120
    %v1029 = vpop.permute.xlu0 %1028
    %v1030 = vsel %vm114, %v1025, 0
    %v1032 = vsel %vm114, %v1027, 0
    %v1034 = vsel %vm114, %v1029, 0
    %1036 = vmatpush.xpose.msra.mxu0 0.0
    %1037 = vmatpush.xpose.msra.mxu0 0.0
    %1038 = vmatpush.xpose.msra.mxu0 0.0
    %1039 = vmatpush.xpose.msra.mxu0 0.0
    %1040 = vmatpush.xpose.msra.mxu0 0.0
    %1041 = vmatpush.xpose.msra.mxu0 0.0
    %1042 = vmatpush.xpose.msra.mxu0 0.0
    %1043 = vmatpush.xpose.msra.mxu0 0.0
    %1044 = vmatpush.xpose.msra.mxu0 0.0
    %1045 = vmatpush.xpose.msra.mxu0 0.0
    %1046 = vmatpush.xpose.msra.mxu0 0.0
    %1047 = vmatpush.xpose.msra.mxu0 0.0
    %1048 = vmatpush.xpose.msra.mxu0 0.0
    %1049 = vmatpush.xpose.msra.mxu0 0.0
    %1050 = vmatpush.xpose.msra.mxu0 %v1034
    %1051 = vmatpush.xpose.msra.mxu0 %v1032
    %1052 = vmatmul.f32.gmra.mxu0 %v1030
    %v1053 = vpop.f32.mrf.mxu0
    %v1054 = vadd.f32 0.0, %v1053
    %1055 = vdwg.mxu0
    %1056 = vrot.lane.b32.xlu0 %v938, 112
    %v1057 = vpop.permute.xlu0 %1056
    %1058 = vrot.lane.b32.xlu0 %v979, 112
    %v1059 = vpop.permute.xlu0 %1058
    %1060 = vrot.lane.b32.xlu0 %v982, 112
    %v1061 = vpop.permute.xlu0 %1060
    %v1062 = vsel %vm114, %v1057, 0
    %v1064 = vsel %vm114, %v1059, 0
    %v1066 = vsel %vm114, %v1061, 0
    %1068 = vmatpush.xpose.msra.mxu0 0.0
    %1069 = vmatpush.xpose.msra.mxu0 0.0
    %1070 = vmatpush.xpose.msra.mxu0 0.0
    %1071 = vmatpush.xpose.msra.mxu0 0.0
    %1072 = vmatpush.xpose.msra.mxu0 0.0
    %1073 = vmatpush.xpose.msra.mxu0 0.0
    %1074 = vmatpush.xpose.msra.mxu0 0.0
    %1075 = vmatpush.xpose.msra.mxu0 0.0
    %1076 = vmatpush.xpose.msra.mxu0 0.0
    %1077 = vmatpush.xpose.msra.mxu0 0.0
    %1078 = vmatpush.xpose.msra.mxu0 0.0
    %1079 = vmatpush.xpose.msra.mxu0 0.0
    %1080 = vmatpush.xpose.msra.mxu0 0.0
    %1081 = vmatpush.xpose.msra.mxu0 0.0
    %1082 = vmatpush.xpose.msra.mxu0 %v1066
    %1083 = vmatpush.xpose.msra.mxu0 %v1064
    %1084 = vmatmul.f32.gmra.mxu0 %v1062
    %v1085 = vpop.f32.mrf.mxu0
    %v1086 = vadd.f32 0.0, %v1085
    %1087 = vdwg.mxu0
    %1088 = vrot.lane.b32.xlu0 %v938, 104
    %v1089 = vpop.permute.xlu0 %1088
    %1090 = vrot.lane.b32.xlu0 %v979, 104
    %v1091 = vpop.permute.xlu0 %1090
    %1092 = vrot.lane.b32.xlu0 %v982, 104
    %v1093 = vpop.permute.xlu0 %1092
    %v1094 = vsel %vm114, %v1089, 0
    %v1096 = vsel %vm114, %v1091, 0
    %v1098 = vsel %vm114, %v1093, 0
    %1100 = vmatpush.xpose.msra.mxu0 0.0
    %1101 = vmatpush.xpose.msra.mxu0 0.0
    %1102 = vmatpush.xpose.msra.mxu0 0.0
    %1103 = vmatpush.xpose.msra.mxu0 0.0
    %1104 = vmatpush.xpose.msra.mxu0 0.0
    %1105 = vmatpush.xpose.msra.mxu0 0.0
    %1106 = vmatpush.xpose.msra.mxu0 0.0
    %1107 = vmatpush.xpose.msra.mxu0 0.0
    %1108 = vmatpush.xpose.msra.mxu0 0.0
    %1109 = vmatpush.xpose.msra.mxu0 0.0
    %1110 = vmatpush.xpose.msra.mxu0 0.0
    %1111 = vmatpush.xpose.msra.mxu0 0.0
    %1112 = vmatpush.xpose.msra.mxu0 0.0
    %1113 = vmatpush.xpose.msra.mxu0 0.0
    %1114 = vmatpush.xpose.msra.mxu0 %v1098
    %1115 = vmatpush.xpose.msra.mxu0 %v1096
    %1116 = vmatmul.f32.gmra.mxu0 %v1094
    %v1117 = vpop.f32.mrf.mxu0
    %v1118 = vadd.f32 0.0, %v1117
    %1119 = vdwg.mxu0
    %v1121 = vsel %vm114, %v941, 0
    %v1124 = vsel %vm114, %v985, 0
    %v1127 = vsel %vm114, %v988, 0
    %1129 = vmatpush.xpose.msra.mxu0 0.0
    %1130 = vmatpush.xpose.msra.mxu0 0.0
    %1131 = vmatpush.xpose.msra.mxu0 0.0
    %1132 = vmatpush.xpose.msra.mxu0 0.0
    %1133 = vmatpush.xpose.msra.mxu0 0.0
    %1134 = vmatpush.xpose.msra.mxu0 0.0
    %1135 = vmatpush.xpose.msra.mxu0 0.0
    %1136 = vmatpush.xpose.msra.mxu0 0.0
    %1137 = vmatpush.xpose.msra.mxu0 0.0
    %1138 = vmatpush.xpose.msra.mxu0 0.0
    %1139 = vmatpush.xpose.msra.mxu0 0.0
    %1140 = vmatpush.xpose.msra.mxu0 0.0
    %1141 = vmatpush.xpose.msra.mxu0 0.0
    %1142 = vmatpush.xpose.msra.mxu0 0.0
    %1143 = vmatpush.xpose.msra.mxu0 %v1127
    %1144 = vmatpush.xpose.msra.mxu0 %v1124
    %1145 = vmatmul.f32.gmra.mxu0 %v1121
    %v1146 = vpop.f32.mrf.mxu0
    %v1147 = vadd.f32 0.0, %v1146
    %1148 = vdwg.mxu0
    %1149 = vrot.lane.b32.xlu0 %v941, 120
    %v1150 = vpop.permute.xlu0 %1149
    %1151 = vrot.lane.b32.xlu0 %v985, 120
    %v1152 = vpop.permute.xlu0 %1151
    %1153 = vrot.lane.b32.xlu0 %v988, 120
    %v1154 = vpop.permute.xlu0 %1153
    %v1155 = vsel %vm114, %v1150, 0
    %v1157 = vsel %vm114, %v1152, 0
    %v1159 = vsel %vm114, %v1154, 0
    %1161 = vmatpush.xpose.msra.mxu0 0.0
    %1162 = vmatpush.xpose.msra.mxu0 0.0
    %1163 = vmatpush.xpose.msra.mxu0 0.0
    %1164 = vmatpush.xpose.msra.mxu0 0.0
    %1165 = vmatpush.xpose.msra.mxu0 0.0
    %1166 = vmatpush.xpose.msra.mxu0 0.0
    %1167 = vmatpush.xpose.msra.mxu0 0.0
    %1168 = vmatpush.xpose.msra.mxu0 0.0
    %1169 = vmatpush.xpose.msra.mxu0 0.0
    %1170 = vmatpush.xpose.msra.mxu0 0.0
    %1171 = vmatpush.xpose.msra.mxu0 0.0
    %1172 = vmatpush.xpose.msra.mxu0 0.0
    %1173 = vmatpush.xpose.msra.mxu0 0.0
    %1174 = vmatpush.xpose.msra.mxu0 0.0
    %1175 = vmatpush.xpose.msra.mxu0 %v1159
    %1176 = vmatpush.xpose.msra.mxu0 %v1157
    %1177 = vmatmul.f32.gmra.mxu0 %v1155
    %v1178 = vpop.f32.mrf.mxu0
    %v1179 = vadd.f32 0.0, %v1178
    %1180 = vdwg.mxu0
    %1181 = vrot.lane.b32.xlu0 %v941, 112
    %v1182 = vpop.permute.xlu0 %1181
    %1183 = vrot.lane.b32.xlu0 %v985, 112
    %v1184 = vpop.permute.xlu0 %1183
    %1185 = vrot.lane.b32.xlu0 %v988, 112
    %v1186 = vpop.permute.xlu0 %1185
    %v1187 = vsel %vm114, %v1182, 0
    %v1189 = vsel %vm114, %v1184, 0
    %v1191 = vsel %vm114, %v1186, 0
    %1193 = vmatpush.xpose.msra.mxu0 0.0
    %1194 = vmatpush.xpose.msra.mxu0 0.0
    %1195 = vmatpush.xpose.msra.mxu0 0.0
    %1196 = vmatpush.xpose.msra.mxu0 0.0
    %1197 = vmatpush.xpose.msra.mxu0 0.0
    %1198 = vmatpush.xpose.msra.mxu0 0.0
    %1199 = vmatpush.xpose.msra.mxu0 0.0
    %1200 = vmatpush.xpose.msra.mxu0 0.0
    %1201 = vmatpush.xpose.msra.mxu0 0.0
    %1202 = vmatpush.xpose.msra.mxu0 0.0
    %1203 = vmatpush.xpose.msra.mxu0 0.0
    %1204 = vmatpush.xpose.msra.mxu0 0.0
    %1205 = vmatpush.xpose.msra.mxu0 0.0
    %1206 = vmatpush.xpose.msra.mxu0 0.0
    %1207 = vmatpush.xpose.msra.mxu0 %v1191
    %1208 = vmatpush.xpose.msra.mxu0 %v1189
    %1209 = vmatmul.f32.gmra.mxu0 %v1187
    %v1210 = vpop.f32.mrf.mxu0
    %v1211 = vadd.f32 0.0, %v1210
    %1212 = vdwg.mxu0
    %1213 = vrot.lane.b32.xlu0 %v941, 104
    %v1214 = vpop.permute.xlu0 %1213
    %1215 = vrot.lane.b32.xlu0 %v985, 104
    %v1216 = vpop.permute.xlu0 %1215
    %1217 = vrot.lane.b32.xlu0 %v988, 104
    %v1218 = vpop.permute.xlu0 %1217
    %v1219 = vsel %vm114, %v1214, 0
    %v1221 = vsel %vm114, %v1216, 0
    %v1223 = vsel %vm114, %v1218, 0
    %1225 = vmatpush.xpose.msra.mxu0 0.0
    %1226 = vmatpush.xpose.msra.mxu0 0.0
    %1227 = vmatpush.xpose.msra.mxu0 0.0
    %1228 = vmatpush.xpose.msra.mxu0 0.0
    %1229 = vmatpush.xpose.msra.mxu0 0.0
    %1230 = vmatpush.xpose.msra.mxu0 0.0
    %1231 = vmatpush.xpose.msra.mxu0 0.0
    %1232 = vmatpush.xpose.msra.mxu0 0.0
    %1233 = vmatpush.xpose.msra.mxu0 0.0
    %1234 = vmatpush.xpose.msra.mxu0 0.0
    %1235 = vmatpush.xpose.msra.mxu0 0.0
    %1236 = vmatpush.xpose.msra.mxu0 0.0
    %1237 = vmatpush.xpose.msra.mxu0 0.0
    %1238 = vmatpush.xpose.msra.mxu0 0.0
    %1239 = vmatpush.xpose.msra.mxu0 %v1223
    %1240 = vmatpush.xpose.msra.mxu0 %v1221
    %1241 = vmatmul.f32.gmra.mxu0 %v1219
    %v1242 = vpop.f32.mrf.mxu0
    %v1243 = vadd.f32 0.0, %v1242
    %1244 = vdwg.mxu0
    %v1245 = vlaneseq
    %v1246 = vand.u32 %v1245, 127
    %vm1247 = vcmp.lt.s32.totalorder %v1246, 12
    %v1248 = vsel %vm1247, %v1022, -1e+30
    %v1249 = vsel %vm1247, %v1054, -1e+30
    %v1250 = vsel %vm1247, %v1086, -1e+30
    %v1251 = vsel %vm1247, %v1118, -1e+30
    %v1252 = vsel %vm1247, %v1147, -1e+30
    %v1253 = vsel %vm1247, %v1179, -1e+30
    %v1254 = vsel %vm1247, %v1211, -1e+30
    %v1255 = vsel %vm1247, %v1243, -1e+30
    %vm1256 = vcmask 130048
    %v1257 = vsel %vm1256, %v1248, -inf
    %1258 = vmax.xlane.f32.xlu0 %v1257
    %v1259 = vpop.xlane.xlu0 %1258
    %v1260 = vsel %vm1256, %v1249, -inf
    %1261 = vmax.xlane.f32.xlu0 %v1260
    %v1262 = vpop.xlane.xlu0 %1261
    %v1263 = vsel %vm1256, %v1250, -inf
    %1264 = vmax.xlane.f32.xlu0 %v1263
    %v1265 = vpop.xlane.xlu0 %1264
    %v1266 = vsel %vm1256, %v1251, -inf
    %1267 = vmax.xlane.f32.xlu0 %v1266
    %v1268 = vpop.xlane.xlu0 %1267
    %v1269 = vsel %vm1256, %v1252, -inf
    %1270 = vmax.xlane.f32.xlu0 %v1269
    %v1271 = vpop.xlane.xlu0 %1270
    %v1272 = vsel %vm1256, %v1253, -inf
    %1273 = vmax.xlane.f32.xlu0 %v1272
    %v1274 = vpop.xlane.xlu0 %1273
    %v1275 = vsel %vm1256, %v1254, -inf
    %1276 = vmax.xlane.f32.xlu0 %v1275
    %v1277 = vpop.xlane.xlu0 %1276
    %v1278 = vsel %vm1256, %v1255, -inf
    %1279 = vmax.xlane.f32.xlu0 %v1278
    %v1280 = vpop.xlane.xlu0 %1279
    %v1281 = vsub.f32 %v1248, %v1259
    %v1282 = vsub.f32 %v1249, %v1262
    %v1283 = vsub.f32 %v1250, %v1265
    %v1284 = vsub.f32 %v1251, %v1268
    %v1285 = vsub.f32 %v1252, %v1271
    %v1286 = vsub.f32 %v1253, %v1274
    %v1287 = vsub.f32 %v1254, %v1277
    %v1288 = vsub.f32 %v1255, %v1280
    %v1289 = vmul.f32 %v1281, 1.442695
    %v1290 = vpow.pop %v1289
    %v1291 = vmul.f32 %v1282, 1.442695
    %v1292 = vpow.pop %v1291
    %v1293 = vmul.f32 %v1283, 1.442695
    %v1294 = vpow.pop %v1293
    %v1295 = vmul.f32 %v1284, 1.442695
    %v1296 = vpow.pop %v1295
    %v1297 = vmul.f32 %v1285, 1.442695
    %v1298 = vpow.pop %v1297
    %v1299 = vmul.f32 %v1286, 1.442695
    %v1300 = vpow.pop %v1299
    %v1301 = vmul.f32 %v1287, 1.442695
    %v1302 = vpow.pop %v1301
    %v1303 = vmul.f32 %v1288, 1.442695
    %v1304 = vpow.pop %v1303
    %v1305 = vsel %vm1256, %v1290, 0.0
    %1306 = vadd.xlane.f32.xlu0 %v1305
    %v1307 = vpop.xlane.xlu0 %1306
    %v1308 = vsel %vm1256, %v1292, 0.0
    %1309 = vadd.xlane.f32.xlu0 %v1308
    %v1310 = vpop.xlane.xlu0 %1309
    %v1311 = vsel %vm1256, %v1294, 0.0
    %1312 = vadd.xlane.f32.xlu0 %v1311
    %v1313 = vpop.xlane.xlu0 %1312
    %v1314 = vsel %vm1256, %v1296, 0.0
    %1315 = vadd.xlane.f32.xlu0 %v1314
    %v1316 = vpop.xlane.xlu0 %1315
    %v1317 = vsel %vm1256, %v1298, 0.0
    %1318 = vadd.xlane.f32.xlu0 %v1317
    %v1319 = vpop.xlane.xlu0 %1318
    %v1320 = vsel %vm1256, %v1300, 0.0
    %1321 = vadd.xlane.f32.xlu0 %v1320
    %v1322 = vpop.xlane.xlu0 %1321
    %v1323 = vsel %vm1256, %v1302, 0.0
    %1324 = vadd.xlane.f32.xlu0 %v1323
    %v1325 = vpop.xlane.xlu0 %1324
    %v1326 = vsel %vm1256, %v1304, 0.0
    %1327 = vadd.xlane.f32.xlu0 %v1326
    %v1328 = vpop.xlane.xlu0 %1327
    %v1329 = vrcp.pop %v1307
    %v1330 = vrcp.pop %v1310
    %v1331 = vrcp.pop %v1313
    %v1332 = vrcp.pop %v1316
    %v1333 = vrcp.pop %v1319
    %v1334 = vrcp.pop %v1322
    %v1335 = vrcp.pop %v1325
    %v1336 = vrcp.pop %v1328
    %v1337 = vmul.f32 %v1307, %v1329
    %v1338 = vmul.f32 %v1310, %v1330
    %v1339 = vmul.f32 %v1313, %v1331
    %v1340 = vmul.f32 %v1316, %v1332
    %v1341 = vmul.f32 %v1319, %v1333
    %v1342 = vmul.f32 %v1322, %v1334
    %v1343 = vmul.f32 %v1325, %v1335
    %v1344 = vmul.f32 %v1328, %v1336
    %v1345 = vsub.f32 2.0, %v1337
    %v1346 = vsub.f32 2.0, %v1338
    %v1347 = vsub.f32 2.0, %v1339
    %v1348 = vsub.f32 2.0, %v1340
    %v1349 = vsub.f32 2.0, %v1341
    %v1350 = vsub.f32 2.0, %v1342
    %v1351 = vsub.f32 2.0, %v1343
    %v1352 = vsub.f32 2.0, %v1344
    %v1353 = vmul.f32 %v1329, %v1345
    %v1354 = vmul.f32 %v1330, %v1346
    %v1355 = vmul.f32 %v1331, %v1347
    %v1356 = vmul.f32 %v1332, %v1348
    %v1357 = vmul.f32 %v1333, %v1349
    %v1358 = vmul.f32 %v1334, %v1350
    %v1359 = vmul.f32 %v1335, %v1351
    %v1360 = vmul.f32 %v1336, %v1352
    %1361 = vrot.lane.b32.xlu0 %v979, 96
    %v1362 = vpop.permute.xlu0 %1361
    %1363 = vrot.lane.b32.xlu0 %v982, 96
    %v1364 = vpop.permute.xlu0 %1363
    %v1368 = vsel %vm1256, %v1290, 0
    %1370 = vmatpush.msra.mxu0 0.0
    %1371 = vmatpush.msra.mxu0 0.0
    %1372 = vmatpush.msra.mxu0 0.0
    %1373 = vmatpush.msra.mxu0 0.0
    %1374 = vmatpush.msra.mxu0 0.0
    %1375 = vmatpush.msra.mxu0 0.0
    %1376 = vmatpush.msra.mxu0 0.0
    %1377 = vmatpush.msra.mxu0 0.0
    %1378 = vmatpush.msra.mxu0 0.0
    %1379 = vmatpush.msra.mxu0 0.0
    %1380 = vmatpush.msra.mxu0 0.0
    %1381 = vmatpush.msra.mxu0 0.0
    %1382 = vmatpush.msra.mxu0 0.0
    %1383 = vmatpush.msra.mxu0 0.0
    %1384 = vmatpush.msra.mxu0 %v1364
    %1385 = vmatpush.msra.mxu0 %v1362
    %1386 = vmatmul.f32.gmra.mxu0 %v1368
    %v1387 = vpop.f32.mrf.mxu0
    %v1388 = vadd.f32 0.0, %v1387
    %1389 = vdwg.mxu0
    %v1390 = vmul.f32 %v1388, %v1353
    %1391 = vrot.lane.b32.xlu0 %v979, 88
    %v1392 = vpop.permute.xlu0 %1391
    %1393 = vrot.lane.b32.xlu0 %v982, 88
    %v1394 = vpop.permute.xlu0 %1393
    %v1398 = vsel %vm1256, %v1292, 0
    %1400 = vmatpush.msra.mxu0 0.0
    %1401 = vmatpush.msra.mxu0 0.0
    %1402 = vmatpush.msra.mxu0 0.0
    %1403 = vmatpush.msra.mxu0 0.0
    %1404 = vmatpush.msra.mxu0 0.0
    %1405 = vmatpush.msra.mxu0 0.0
    %1406 = vmatpush.msra.mxu0 0.0
    %1407 = vmatpush.msra.mxu0 0.0
    %1408 = vmatpush.msra.mxu0 0.0
    %1409 = vmatpush.msra.mxu0 0.0
    %1410 = vmatpush.msra.mxu0 0.0
    %1411 = vmatpush.msra.mxu0 0.0
    %1412 = vmatpush.msra.mxu0 0.0
    %1413 = vmatpush.msra.mxu0 0.0
    %1414 = vmatpush.msra.mxu0 %v1394
    %1415 = vmatpush.msra.mxu0 %v1392
    %1416 = vmatmul.f32.gmra.mxu0 %v1398
    %v1417 = vpop.f32.mrf.mxu0
    %v1418 = vadd.f32 0.0, %v1417
    %1419 = vdwg.mxu0
    %v1420 = vmul.f32 %v1418, %v1354
    %v1422 = vsel %vm114, %v1420, 0
    %1424 = vmatpush.msra.mxu0 0.0
    %1425 = vmatpush.msra.mxu0 0.0
    %1426 = vmatpush.msra.mxu0 0.0
    %1427 = vmatpush.msra.mxu0 0.0
    %1428 = vmatpush.msra.mxu0 0.0
    %1429 = vmatpush.msra.mxu0 0.0
    %1430 = vmatpush.msra.mxu0 0.0
    %1431 = vmatpush.msra.mxu0 0.0
    %1432 = vmatpush.msra.mxu0 0.0
    %1433 = vmatpush.msra.mxu0 0.0
    %1434 = vmatpush.msra.mxu0 0.0
    %1435 = vmatpush.msra.mxu0 0.0
    %1436 = vmatpush.msra.mxu0 0.0
    %1437 = vmatpush.msra.mxu0 0.0
    %1438 = vmatpush.msra.mxu0 0.0
    %1439 = vmatpush.msra.mxu0 %v991
    %1440 = vmatmul.f32.gmra.mxu0 %v1422
    %v1441 = vpop.f32.mrf.mxu0
    %v1442 = vadd.f32 0.0, %v1441
    %1443 = vdwg.mxu0
    %v1445 = vsel %vm114, %v1390, 0
    %1447 = vmatpush.msra.mxu0 0.0
    %1448 = vmatpush.msra.mxu0 0.0
    %1449 = vmatpush.msra.mxu0 0.0
    %1450 = vmatpush.msra.mxu0 0.0
    %1451 = vmatpush.msra.mxu0 0.0
    %1452 = vmatpush.msra.mxu0 0.0
    %1453 = vmatpush.msra.mxu0 0.0
    %1454 = vmatpush.msra.mxu0 0.0
    %1455 = vmatpush.msra.mxu0 0.0
    %1456 = vmatpush.msra.mxu0 0.0
    %1457 = vmatpush.msra.mxu0 0.0
    %1458 = vmatpush.msra.mxu0 0.0
    %1459 = vmatpush.msra.mxu0 0.0
    %1460 = vmatpush.msra.mxu0 0.0
    %1461 = vmatpush.msra.mxu0 0.0
    %1462 = vmatpush.msra.mxu0 %v990
    %1463 = vmatmul.f32.gmra.mxu0 %v1445
    %v1464 = vpop.f32.mrf.mxu0
    %v1465 = vadd.f32 %v1442, %v1464
    %1466 = vdwg.mxu0
    %1467 = vrot.lane.b32.xlu0 %v979, 80
    %v1468 = vpop.permute.xlu0 %1467
    %1469 = vrot.lane.b32.xlu0 %v982, 80
    %v1470 = vpop.permute.xlu0 %1469
    %v1474 = vsel %vm1256, %v1294, 0
    %1476 = vmatpush.msra.mxu0 0.0
    %1477 = vmatpush.msra.mxu0 0.0
    %1478 = vmatpush.msra.mxu0 0.0
    %1479 = vmatpush.msra.mxu0 0.0
    %1480 = vmatpush.msra.mxu0 0.0
    %1481 = vmatpush.msra.mxu0 0.0
    %1482 = vmatpush.msra.mxu0 0.0
    %1483 = vmatpush.msra.mxu0 0.0
    %1484 = vmatpush.msra.mxu0 0.0
    %1485 = vmatpush.msra.mxu0 0.0
    %1486 = vmatpush.msra.mxu0 0.0
    %1487 = vmatpush.msra.mxu0 0.0
    %1488 = vmatpush.msra.mxu0 0.0
    %1489 = vmatpush.msra.mxu0 0.0
    %1490 = vmatpush.msra.mxu0 %v1470
    %1491 = vmatpush.msra.mxu0 %v1468
    %1492 = vmatmul.f32.gmra.mxu0 %v1474
    %v1493 = vpop.f32.mrf.mxu0
    %v1494 = vadd.f32 0.0, %v1493
    %1495 = vdwg.mxu0
    %v1496 = vmul.f32 %v1494, %v1355
    %v1498 = vsel %vm114, %v1496, 0
    %1500 = vmatpush.msra.mxu0 0.0
    %1501 = vmatpush.msra.mxu0 0.0
    %1502 = vmatpush.msra.mxu0 0.0
    %1503 = vmatpush.msra.mxu0 0.0
    %1504 = vmatpush.msra.mxu0 0.0
    %1505 = vmatpush.msra.mxu0 0.0
    %1506 = vmatpush.msra.mxu0 0.0
    %1507 = vmatpush.msra.mxu0 0.0
    %1508 = vmatpush.msra.mxu0 0.0
    %1509 = vmatpush.msra.mxu0 0.0
    %1510 = vmatpush.msra.mxu0 0.0
    %1511 = vmatpush.msra.mxu0 0.0
    %1512 = vmatpush.msra.mxu0 0.0
    %1513 = vmatpush.msra.mxu0 0.0
    %1514 = vmatpush.msra.mxu0 0.0
    %1515 = vmatpush.msra.mxu0 %v992
    %1516 = vmatmul.f32.gmra.mxu0 %v1498
    %v1517 = vpop.f32.mrf.mxu0
    %v1518 = vadd.f32 0.0, %v1517
    %1519 = vdwg.mxu0
    %v1520 = vadd.f32 %v1465, %v1518
    %1521 = vrot.lane.b32.xlu0 %v979, 72
    %v1522 = vpop.permute.xlu0 %1521
    %1523 = vrot.lane.b32.xlu0 %v982, 72
    %v1524 = vpop.permute.xlu0 %1523
    %v1528 = vsel %vm1256, %v1296, 0
    %1530 = vmatpush.msra.mxu0 0.0
    %1531 = vmatpush.msra.mxu0 0.0
    %1532 = vmatpush.msra.mxu0 0.0
    %1533 = vmatpush.msra.mxu0 0.0
    %1534 = vmatpush.msra.mxu0 0.0
    %1535 = vmatpush.msra.mxu0 0.0
    %1536 = vmatpush.msra.mxu0 0.0
    %1537 = vmatpush.msra.mxu0 0.0
    %1538 = vmatpush.msra.mxu0 0.0
    %1539 = vmatpush.msra.mxu0 0.0
    %1540 = vmatpush.msra.mxu0 0.0
    %1541 = vmatpush.msra.mxu0 0.0
    %1542 = vmatpush.msra.mxu0 0.0
    %1543 = vmatpush.msra.mxu0 0.0
    %1544 = vmatpush.msra.mxu0 %v1524
    %1545 = vmatpush.msra.mxu0 %v1522
    %1546 = vmatmul.f32.gmra.mxu0 %v1528
    %v1547 = vpop.f32.mrf.mxu0
    %v1548 = vadd.f32 0.0, %v1547
    %1549 = vdwg.mxu0
    %v1550 = vmul.f32 %v1548, %v1356
    %v1552 = vsel %vm114, %v1550, 0
    %1554 = vmatpush.msra.mxu0 0.0
    %1555 = vmatpush.msra.mxu0 0.0
    %1556 = vmatpush.msra.mxu0 0.0
    %1557 = vmatpush.msra.mxu0 0.0
    %1558 = vmatpush.msra.mxu0 0.0
    %1559 = vmatpush.msra.mxu0 0.0
    %1560 = vmatpush.msra.mxu0 0.0
    %1561 = vmatpush.msra.mxu0 0.0
    %1562 = vmatpush.msra.mxu0 0.0
    %1563 = vmatpush.msra.mxu0 0.0
    %1564 = vmatpush.msra.mxu0 0.0
    %1565 = vmatpush.msra.mxu0 0.0
    %1566 = vmatpush.msra.mxu0 0.0
    %1567 = vmatpush.msra.mxu0 0.0
    %1568 = vmatpush.msra.mxu0 0.0
    %1569 = vmatpush.msra.mxu0 %v993
    %1570 = vmatmul.f32.gmra.mxu0 %v1552
    %v1571 = vpop.f32.mrf.mxu0
    %v1572 = vadd.f32 0.0, %v1571
    %1573 = vdwg.mxu0
    %v1574 = vadd.f32 %v1520, %v1572
    %1575 = vrot.lane.b32.xlu0 %v985, 96
    %v1576 = vpop.permute.xlu0 %1575
    %1577 = vrot.lane.b32.xlu0 %v988, 96
    %v1578 = vpop.permute.xlu0 %1577
    %v1582 = vsel %vm1256, %v1298, 0
    %1584 = vmatpush.msra.mxu0 0.0
    %1585 = vmatpush.msra.mxu0 0.0
    %1586 = vmatpush.msra.mxu0 0.0
    %1587 = vmatpush.msra.mxu0 0.0
    %1588 = vmatpush.msra.mxu0 0.0
    %1589 = vmatpush.msra.mxu0 0.0
    %1590 = vmatpush.msra.mxu0 0.0
    %1591 = vmatpush.msra.mxu0 0.0
    %1592 = vmatpush.msra.mxu0 0.0
    %1593 = vmatpush.msra.mxu0 0.0
    %1594 = vmatpush.msra.mxu0 0.0
    %1595 = vmatpush.msra.mxu0 0.0
    %1596 = vmatpush.msra.mxu0 0.0
    %1597 = vmatpush.msra.mxu0 0.0
    %1598 = vmatpush.msra.mxu0 %v1578
    %1599 = vmatpush.msra.mxu0 %v1576
    %1600 = vmatmul.f32.gmra.mxu0 %v1582
    %v1601 = vpop.f32.mrf.mxu0
    %v1602 = vadd.f32 0.0, %v1601
    %1603 = vdwg.mxu0
    %v1604 = vmul.f32 %v1602, %v1357
    %1605 = vrot.lane.b32.xlu0 %v985, 88
    %v1606 = vpop.permute.xlu0 %1605
    %1607 = vrot.lane.b32.xlu0 %v988, 88
    %v1608 = vpop.permute.xlu0 %1607
    %v1612 = vsel %vm1256, %v1300, 0
    %1614 = vmatpush.msra.mxu0 0.0
    %1615 = vmatpush.msra.mxu0 0.0
    %1616 = vmatpush.msra.mxu0 0.0
    %1617 = vmatpush.msra.mxu0 0.0
    %1618 = vmatpush.msra.mxu0 0.0
    %1619 = vmatpush.msra.mxu0 0.0
    %1620 = vmatpush.msra.mxu0 0.0
    %1621 = vmatpush.msra.mxu0 0.0
    %1622 = vmatpush.msra.mxu0 0.0
    %1623 = vmatpush.msra.mxu0 0.0
    %1624 = vmatpush.msra.mxu0 0.0
    %1625 = vmatpush.msra.mxu0 0.0
    %1626 = vmatpush.msra.mxu0 0.0
    %1627 = vmatpush.msra.mxu0 0.0
    %1628 = vmatpush.msra.mxu0 %v1608
    %1629 = vmatpush.msra.mxu0 %v1606
    %1630 = vmatmul.f32.gmra.mxu0 %v1612
    %v1631 = vpop.f32.mrf.mxu0
    %v1632 = vadd.f32 0.0, %v1631
    %1633 = vdwg.mxu0
    %v1634 = vmul.f32 %v1632, %v1358
    %v1636 = vsel %vm114, %v1634, 0
    %1638 = vmatpush.msra.mxu0 0.0
    %1639 = vmatpush.msra.mxu0 0.0
    %1640 = vmatpush.msra.mxu0 0.0
    %1641 = vmatpush.msra.mxu0 0.0
    %1642 = vmatpush.msra.mxu0 0.0
    %1643 = vmatpush.msra.mxu0 0.0
    %1644 = vmatpush.msra.mxu0 0.0
    %1645 = vmatpush.msra.mxu0 0.0
    %1646 = vmatpush.msra.mxu0 0.0
    %1647 = vmatpush.msra.mxu0 0.0
    %1648 = vmatpush.msra.mxu0 0.0
    %1649 = vmatpush.msra.mxu0 0.0
    %1650 = vmatpush.msra.mxu0 0.0
    %1651 = vmatpush.msra.mxu0 0.0
    %1652 = vmatpush.msra.mxu0 0.0
    %1653 = vmatpush.msra.mxu0 %v991
    %1654 = vmatmul.f32.gmra.mxu0 %v1636
    %v1655 = vpop.f32.mrf.mxu0
    %v1656 = vadd.f32 0.0, %v1655
    %1657 = vdwg.mxu0
    %v1659 = vsel %vm114, %v1604, 0
    %1661 = vmatpush.msra.mxu0 0.0
    %1662 = vmatpush.msra.mxu0 0.0
    %1663 = vmatpush.msra.mxu0 0.0
    %1664 = vmatpush.msra.mxu0 0.0
    %1665 = vmatpush.msra.mxu0 0.0
    %1666 = vmatpush.msra.mxu0 0.0
    %1667 = vmatpush.msra.mxu0 0.0
    %1668 = vmatpush.msra.mxu0 0.0
    %1669 = vmatpush.msra.mxu0 0.0
    %1670 = vmatpush.msra.mxu0 0.0
    %1671 = vmatpush.msra.mxu0 0.0
    %1672 = vmatpush.msra.mxu0 0.0
    %1673 = vmatpush.msra.mxu0 0.0
    %1674 = vmatpush.msra.mxu0 0.0
    %1675 = vmatpush.msra.mxu0 0.0
    %1676 = vmatpush.msra.mxu0 %v990
    %1677 = vmatmul.f32.gmra.mxu0 %v1659
    %v1678 = vpop.f32.mrf.mxu0
    %v1679 = vadd.f32 %v1656, %v1678
    %1680 = vdwg.mxu0
    %1681 = vrot.lane.b32.xlu0 %v985, 80
    %v1682 = vpop.permute.xlu0 %1681
    %1683 = vrot.lane.b32.xlu0 %v988, 80
    %v1684 = vpop.permute.xlu0 %1683
    %v1688 = vsel %vm1256, %v1302, 0
    %1690 = vmatpush.msra.mxu0 0.0
    %1691 = vmatpush.msra.mxu0 0.0
    %1692 = vmatpush.msra.mxu0 0.0
    %1693 = vmatpush.msra.mxu0 0.0
    %1694 = vmatpush.msra.mxu0 0.0
    %1695 = vmatpush.msra.mxu0 0.0
    %1696 = vmatpush.msra.mxu0 0.0
    %1697 = vmatpush.msra.mxu0 0.0
    %1698 = vmatpush.msra.mxu0 0.0
    %1699 = vmatpush.msra.mxu0 0.0
    %1700 = vmatpush.msra.mxu0 0.0
    %1701 = vmatpush.msra.mxu0 0.0
    %1702 = vmatpush.msra.mxu0 0.0
    %1703 = vmatpush.msra.mxu0 0.0
    %1704 = vmatpush.msra.mxu0 %v1684
    %1705 = vmatpush.msra.mxu0 %v1682
    %1706 = vmatmul.f32.gmra.mxu0 %v1688
    %v1707 = vpop.f32.mrf.mxu0
    %v1708 = vadd.f32 0.0, %v1707
    %1709 = vdwg.mxu0
    %v1710 = vmul.f32 %v1708, %v1359
    %v1712 = vsel %vm114, %v1710, 0
    %1714 = vmatpush.msra.mxu0 0.0
    %1715 = vmatpush.msra.mxu0 0.0
    %1716 = vmatpush.msra.mxu0 0.0
    %1717 = vmatpush.msra.mxu0 0.0
    %1718 = vmatpush.msra.mxu0 0.0
    %1719 = vmatpush.msra.mxu0 0.0
    %1720 = vmatpush.msra.mxu0 0.0
    %1721 = vmatpush.msra.mxu0 0.0
    %1722 = vmatpush.msra.mxu0 0.0
    %1723 = vmatpush.msra.mxu0 0.0
    %1724 = vmatpush.msra.mxu0 0.0
    %1725 = vmatpush.msra.mxu0 0.0
    %1726 = vmatpush.msra.mxu0 0.0
    %1727 = vmatpush.msra.mxu0 0.0
    %1728 = vmatpush.msra.mxu0 0.0
    %1729 = vmatpush.msra.mxu0 %v992
    %1730 = vmatmul.f32.gmra.mxu0 %v1712
    %v1731 = vpop.f32.mrf.mxu0
    %v1732 = vadd.f32 0.0, %v1731
    %1733 = vdwg.mxu0
    %v1734 = vadd.f32 %v1679, %v1732
    %1735 = vrot.lane.b32.xlu0 %v985, 72
    %v1736 = vpop.permute.xlu0 %1735
    %1737 = vrot.lane.b32.xlu0 %v988, 72
    %v1738 = vpop.permute.xlu0 %1737
    %v1742 = vsel %vm1256, %v1304, 0
    %1744 = vmatpush.msra.mxu0 0.0
    %1745 = vmatpush.msra.mxu0 0.0
    %1746 = vmatpush.msra.mxu0 0.0
    %1747 = vmatpush.msra.mxu0 0.0
    %1748 = vmatpush.msra.mxu0 0.0
    %1749 = vmatpush.msra.mxu0 0.0
    %1750 = vmatpush.msra.mxu0 0.0
    %1751 = vmatpush.msra.mxu0 0.0
    %1752 = vmatpush.msra.mxu0 0.0
    %1753 = vmatpush.msra.mxu0 0.0
    %1754 = vmatpush.msra.mxu0 0.0
    %1755 = vmatpush.msra.mxu0 0.0
    %1756 = vmatpush.msra.mxu0 0.0
    %1757 = vmatpush.msra.mxu0 0.0
    %1758 = vmatpush.msra.mxu0 %v1738
    %1759 = vmatpush.msra.mxu0 %v1736
    %1760 = vmatmul.f32.gmra.mxu0 %v1742
    %v1761 = vpop.f32.mrf.mxu0
    %v1762 = vadd.f32 0.0, %v1761
    %1763 = vdwg.mxu0
    %v1764 = vmul.f32 %v1762, %v1360
    %v1766 = vsel %vm114, %v1764, 0
    %1768 = vmatpush.msra.mxu0 0.0
    %1769 = vmatpush.msra.mxu0 0.0
    %1770 = vmatpush.msra.mxu0 0.0
    %1771 = vmatpush.msra.mxu0 0.0
    %1772 = vmatpush.msra.mxu0 0.0
    %1773 = vmatpush.msra.mxu0 0.0
    %1774 = vmatpush.msra.mxu0 0.0
    %1775 = vmatpush.msra.mxu0 0.0
    %1776 = vmatpush.msra.mxu0 0.0
    %1777 = vmatpush.msra.mxu0 0.0
    %1778 = vmatpush.msra.mxu0 0.0
    %1779 = vmatpush.msra.mxu0 0.0
    %1780 = vmatpush.msra.mxu0 0.0
    %1781 = vmatpush.msra.mxu0 0.0
    %1782 = vmatpush.msra.mxu0 0.0
    %1783 = vmatpush.msra.mxu0 %v993
    %1784 = vmatmul.f32.gmra.mxu0 %v1766
    %v1785 = vpop.f32.mrf.mxu0
    %v1786 = vadd.f32 0.0, %v1785
    %1787 = vdwg.mxu0
    %v1788 = vadd.f32 %v1734, %v1786
    %v1789 = vperm.slane %v994, 0
    %v1790 = vadd.f32 %v1574, %v1789
    %v1791 = vadd.f32 %v1788, %v1789
    %v1792 = vadd.f32 %v906, %v1790
    %v1793 = vadd.f32 %v907, %v1791
    %v1794 = vsel %vm76, %v1792, 0.0
    %1795 = vadd.xlane.f32.xlu0 %v1794
    %v1796 = vpop.xlane.xlu0 %1795
    %v1797 = vsel %vm76, %v1793, 0.0
    %1798 = vadd.xlane.f32.xlu0 %v1797
    %v1799 = vpop.xlane.xlu0 %1798
    %v1800 = vmul.f32 %v1796, %v859
    %v1801 = vmul.f32 %v1799, %v859
    %v1802 = vmul.f32 %v1792, %v1792
    %v1803 = vmul.f32 %v1793, %v1793
    %v1804 = vsel %vm76, %v1802, 0.0
    %1805 = vadd.xlane.f32.xlu0 %v1804
    %v1806 = vpop.xlane.xlu0 %1805
    %v1807 = vsel %vm76, %v1803, 0.0
    %1808 = vadd.xlane.f32.xlu0 %v1807
    %v1809 = vpop.xlane.xlu0 %1808
    %v1810 = vmul.f32 %v1806, %v859
    %v1811 = vmul.f32 %v1809, %v859
    %v1812 = vsub.f32 %v1792, %v1800
    %v1813 = vsub.f32 %v1793, %v1801
    %v1814 = vmul.f32 %v1800, %v1800
    %v1815 = vmul.f32 %v1801, %v1801
    %v1816 = vsub.f32 %v1810, %v1814
    %v1817 = vsub.f32 %v1811, %v1815
    %v1818 = vadd.f32 %v1816, 1e-05
    %v1819 = vadd.f32 %v1817, 1e-05
    %v1820 = vrsqrt.pop %v1818
    %v1821 = vmul.f32 %v1820, %v1818
    %v1822 = vmul.f32 %v1821, %v1820
    %v1823 = vmul.f32 0.5, %v1822
    %v1824 = vsub.f32 1.5, %v1823
    %v1825 = vmul.f32 %v1820, %v1824
    %vm1826 = vweird.f32 %v1818
    %vm1827 = vweird.f32 %v1820
    %vm1828 = vmor %vm1826, %vm1827
    %v1829 = vsel %vm1828, %v1820, %v1825
    %v1830 = vrsqrt.pop %v1819
    %v1831 = vmul.f32 %v1830, %v1819
    %v1832 = vmul.f32 %v1831, %v1830
    %v1833 = vmul.f32 0.5, %v1832
    %v1834 = vsub.f32 1.5, %v1833
    %v1835 = vmul.f32 %v1830, %v1834
    %vm1836 = vweird.f32 %v1819
    %vm1837 = vweird.f32 %v1830
    %vm1838 = vmor %vm1836, %vm1837
    %v1839 = vsel %vm1838, %v1830, %v1835
    %v1840 = vmul.f32 %v1812, %v1829
    %v1841 = vmul.f32 %v1813, %v1839
    %v1842 = vmul.f32 %v1840, %v902
    %v1843 = vmul.f32 %v1841, %v902
    %v1844 = vadd.f32 %v1842, %v905
    %v1845 = vadd.f32 %v1843, %v905
    %v1846 = vld [vmem:[#allocation7 + $0xd0] sm:$0xff]
    %v1847 = vld [vmem:[#allocation7 + $0xd8] sm:$0xff]
    %v1848 = vld [vmem:[#allocation7 + $0xe0] sm:$0xff]
    %v1849 = vld [vmem:[#allocation7 + $0xe8] sm:$0xff]
    %v1850 = vld [vmem:[#allocation7 + $0xf0] sm:$0x1]
    %v1851 = vperm.slane %v1850, 0
    %v1853 = vsel %vm76, %v1844, 0
    %v1856 = vsel %vm76, %v1845, 0
    %1858 = vmatpush.msra.mxu0 0.0
    %1859 = vmatpush.msra.mxu0 0.0
    %1860 = vmatpush.msra.mxu0 0.0
    %1861 = vmatpush.msra.mxu0 0.0
    %1862 = vmatpush.msra.mxu0 0.0
    %1863 = vmatpush.msra.mxu0 0.0
    %1864 = vmatpush.msra.mxu0 0.0
    %1865 = vmatpush.msra.mxu0 0.0
    %1866 = vmatpush.msra.mxu0 0.0
    %1867 = vmatpush.msra.mxu0 0.0
    %1868 = vmatpush.msra.mxu0 0.0
    %1869 = vmatpush.msra.mxu0 0.0
    %1870 = vmatpush.msra.mxu0 %v1849
    %1871 = vmatpush.msra.mxu0 %v1848
    %1872 = vmatpush.msra.mxu0 %v1847
    %1873 = vmatpush.msra.mxu0 %v1846
    %1874 = vmatmul.f32.gmra.mxu0 %v1853
    %v1875 = vpop.f32.mrf.mxu0
    %v1876 = vadd.f32 %v1851, %v1875
    %1877 = vmatmul.f32.gmra.mxu0 %v1856
    %v1878 = vpop.f32.mrf.mxu0
    %v1879 = vadd.f32 %v1851, %v1878
    %1880 = vdwg.mxu0
    %v1881 = vmax.f32 %v1876, 0.0
    %v1882 = vmax.f32 %v1879, 0.0
    %v1883 = vld [vmem:[#allocation7 + $0xf8] sm:$0xff]
    %v1884 = vld [vmem:[#allocation7 + $0x100] sm:$0xff]
    %v1885 = vld [vmem:[#allocation7 + $0x108] sm:$0xff]
    %v1886 = vld [vmem:[#allocation7 + $0x110] sm:$0xff]
    %v1887 = vld [vmem:[#allocation7 + $0x118] sm:$0xff]
    %v1888 = vld [vmem:[#allocation7 + $0x120] sm:$0xff]
    %v1889 = vld [vmem:[#allocation7 + $0x128] sm:$0xff]
    %v1890 = vld [vmem:[#allocation7 + $0x130] sm:$0xff]
    %v1891 = vld [vmem:[#allocation7 + $0x138] sm:$0x1]
    %v1892 = vperm.slane %v1891, 0
    %vm1893 = vcmask 523264
    %v1895 = vsel %vm1893, %v1881, 0
    %v1898 = vsel %vm1893, %v1882, 0
    %1900 = vmatpush.msra.mxu0 0.0
    %1901 = vmatpush.msra.mxu0 0.0
    %1902 = vmatpush.msra.mxu0 0.0
    %1903 = vmatpush.msra.mxu0 0.0
    %1904 = vmatpush.msra.mxu0 0.0
    %1905 = vmatpush.msra.mxu0 0.0
    %1906 = vmatpush.msra.mxu0 0.0
    %1907 = vmatpush.msra.mxu0 0.0
    %1908 = vmatpush.msra.mxu0 %v1890
    %1909 = vmatpush.msra.mxu0 %v1889
    %1910 = vmatpush.msra.mxu0 %v1888
    %1911 = vmatpush.msra.mxu0 %v1887
    %1912 = vmatpush.msra.mxu0 %v1886
    %1913 = vmatpush.msra.mxu0 %v1885
    %1914 = vmatpush.msra.mxu0 %v1884
    %1915 = vmatpush.msra.mxu0 %v1883
    %1916 = vmatmul.f32.gmra.mxu0 %v1895
    %v1917 = vpop.f32.mrf.mxu0
    %v1918 = vadd.f32 %v1892, %v1917
    %1919 = vmatmul.f32.gmra.mxu0 %v1898
    %v1920 = vpop.f32.mrf.mxu0
    %v1921 = vadd.f32 %v1892, %v1920
    %1922 = vdwg.mxu0
    %v1923 = vadd.f32 %v1844, %v1918
    %v1924 = vadd.f32 %v1845, %v1921
    %v1925 = vsel %vm76, %v1923, 0.0
    %1926 = vadd.xlane.f32.xlu0 %v1925
    %v1927 = vpop.xlane.xlu0 %1926
    %v1928 = vsel %vm76, %v1924, 0.0
    %1929 = vadd.xlane.f32.xlu0 %v1928
    %v1930 = vpop.xlane.xlu0 %1929
    %v1931 = vmul.f32 %v1927, %v859
    %v1932 = vmul.f32 %v1930, %v859
    %v1933 = vmul.f32 %v1923, %v1923
    %v1934 = vmul.f32 %v1924, %v1924
    %v1935 = vsel %vm76, %v1933, 0.0
    %1936 = vadd.xlane.f32.xlu0 %v1935
    %v1937 = vpop.xlane.xlu0 %1936
    %v1938 = vsel %vm76, %v1934, 0.0
    %1939 = vadd.xlane.f32.xlu0 %v1938
    %v1940 = vpop.xlane.xlu0 %1939
    %v1941 = vmul.f32 %v1937, %v859
    %v1942 = vmul.f32 %v1940, %v859
    %v1943 = vsub.f32 %v1923, %v1931
    %v1944 = vsub.f32 %v1924, %v1932
    %v1945 = vmul.f32 %v1931, %v1931
    %v1946 = vmul.f32 %v1932, %v1932
    %v1947 = vsub.f32 %v1941, %v1945
    %v1948 = vsub.f32 %v1942, %v1946
    %v1949 = vadd.f32 %v1947, 1e-05
    %v1950 = vadd.f32 %v1948, 1e-05
    %v1951 = vrsqrt.pop %v1949
    %v1952 = vmul.f32 %v1951, %v1949
    %v1953 = vmul.f32 %v1952, %v1951
    %v1954 = vmul.f32 0.5, %v1953
    %v1955 = vsub.f32 1.5, %v1954
    %v1956 = vmul.f32 %v1951, %v1955
    %vm1957 = vweird.f32 %v1949
    %vm1958 = vweird.f32 %v1951
    %vm1959 = vmor %vm1957, %vm1958
    %v1960 = vsel %vm1959, %v1951, %v1956
    %v1961 = vrsqrt.pop %v1950
    %v1962 = vmul.f32 %v1961, %v1950
    %v1963 = vmul.f32 %v1962, %v1961
    %v1964 = vmul.f32 0.5, %v1963
    %v1965 = vsub.f32 1.5, %v1964
    %v1966 = vmul.f32 %v1961, %v1965
    %vm1967 = vweird.f32 %v1950
    %vm1968 = vweird.f32 %v1961
    %vm1969 = vmor %vm1967, %vm1968
    %v1970 = vsel %vm1969, %v1961, %v1966
    %v1971 = vmul.f32 %v1943, %v1960
    %v1972 = vmul.f32 %v1944, %v1970
    %v1973 = vmul.f32 %v1971, %v902
    %v1974 = vmul.f32 %v1972, %v902
    %v1975 = vadd.f32 %v1973, %v905
    %v1976 = vadd.f32 %v1974, %v905
    %1977 = vst.msk [vmem:[#allocation8] sm:$0xff] %vm76, %v1975
    %1978 = vst.msk [vmem:[#allocation8 + $0x8] sm:$0xff] %vm76, %v1976
    // Predicated region
    $region26: #{tpu_custom_call.1} parent=1 // pred_check
      _
    $region27: #{tpu_custom_call.1} parent=1 // pred_check_branch
      %1980 = sbr.rel (0) target = $region29
    $region28: #{tpu_custom_call.1} parent=1 // pred_region
      %1982 = vsyncadd [#allocation4], 0
      %s1983 = sshll.u32 [#allocation8], 4
      %s1984 = int_to_ptr.vmem [resolvable:$true] %s1983
      %s1985 = sshll.u32 %s3, 4
      %s1986 = int_to_ptr.hbm [resolvable:$true] %s1985
      %1991 = dma.vmem_to_hbm [thread:$0]  %s1984, 256, %s1986, [#allocation4], 128, 128, 8
    $region29: #{tpu_custom_call.1} parent=1 // pred_fallthru
      _
    // Predicated region
    $region30: #{tpu_custom_call.1} parent=1 // pred_check
      _
    $region31: #{tpu_custom_call.1} parent=1 // pred_check_branch
      %1993 = sbr.rel (0) target = $region33
    $region32: #{tpu_custom_call.1} parent=1 // pred_region
      %1995 = dma.done [#allocation4], 256
    $region33: #{tpu_custom_call.1} parent=1 // pred_fallthru
      _
    %1996 = vsyncpa [#allocation3], 1
    %1997 = vsyncpa [#allocation6], 1
    %1998 = vsyncpa [#allocation4], 1

</llo_original>
